<compile_context>
chip_gen: v6e
topology: v6e:2x2x1
jax: 0.10.0
libtpu: 0.0.40
codegen_flags: <defaults>
</compile_context>

<pallas_src>
import functools

import jax
import jax.numpy as jnp
from jax.experimental import pallas as pl
from jax.experimental.pallas import tpu as pltpu


# ----------------------------------------------------------------------------
# Fused Pallas kernel
# ----------------------------------------------------------------------------
def _conv_bn_relu(y_in, cat_ref, w_ref, s_ref, b_ref, ks):
    """Conv1d(ks, same, no bias) + folded BN + ReLU as one packed-K matmul.

    y_in:    (TN, L, C_in) f32 activation from the previous layer.
    cat_ref: (TN, L, ks*C_in) bf16 VMEM scratch holding the packed taps.
    w_ref:   (ks*C_in, C_out) bf16 packed conv weight.
    s_ref/b_ref: (1, C_out) f32 folded BatchNorm scale / bias.
    returns: (TN, L, C_out) f32.
    """
    tn, L, c_in = y_in.shape
    c_out = w_ref.shape[1]
    pad = ks // 2
    y_b = y_in.astype(cat_ref.dtype)

    # Pack the ks shifted taps along the channel (lane) axis of the scratch.
    # Column block k holds x[t + k - pad] with zero fill at the edges.
    for k in range(ks):
        sh = k - pad
        col = slice(k * c_in, (k + 1) * c_in)
        if sh < 0:
            cat_ref[:, : -sh, col] = jnp.zeros((tn, -sh, c_in), cat_ref.dtype)
            cat_ref[:, -sh:, col] = y_b[:, : L + sh, :]
        elif sh > 0:
            cat_ref[:, : L - sh, col] = y_b[:, sh:, :]
            cat_ref[:, L - sh:, col] = jnp.zeros((tn, sh, c_in), cat_ref.dtype)
        else:
            cat_ref[:, :, col] = y_b

    acc = jnp.dot(cat_ref[...].reshape(tn * L, ks * c_in), w_ref[...],
                  preferred_element_type=jnp.float32)          # (TN*L, C_out) f32
    y = jnp.maximum(acc * s_ref[...] + b_ref[...], 0.0)        # f32 epilogue
    return y.reshape(tn, L, c_out)


def fcn_fused_kernel(x1_ref, w1_ref, s1_ref, b1_ref,
                     w2_ref, s2_ref, b2_ref,
                     w3_ref, s3_ref, b3_ref,
                     wfc_ref, bfc_ref,
                     o_ref,
                     cat2_ref, cat3_ref, *, kss):
    """conv1 -> conv2 -> conv3 -> GAP -> fc_classification for one N-tile."""
    tn, L, k1 = x1_ref.shape
    _, ks2, ks3 = kss
    c1 = w1_ref.shape[1]

    # ---- layer 1: taps pre-packed in the wrapper (K = ks1*c_in) -------------
    a1 = jnp.dot(x1_ref[...].reshape(tn * L, k1), w1_ref[...],
                 preferred_element_type=jnp.float32)
    y1 = jnp.maximum(a1 * s1_ref[...] + b1_ref[...], 0.0).reshape(tn, L, c1)

    # ---- layers 2 & 3: packed-K (640 / 768) conv + BN + ReLU ----------------
    y2 = _conv_bn_relu(y1, cat2_ref, w2_ref, s2_ref, b2_ref, ks2)
    y3 = _conv_bn_relu(y2, cat3_ref, w3_ref, s3_ref, b3_ref, ks3)

    # ---- GAP over time + classification head (fused, stays in VMEM) --------
    g = jnp.mean(y3, axis=1)                                   # (TN, C3) f32
    logits = jnp.dot(g.astype(jnp.bfloat16), wfc_ref[...],
                     preferred_element_type=jnp.float32) + bfc_ref[...]
    o_ref[...] = logits.reshape(o_ref.shape)


# ----------------------------------------------------------------------------
# Wrapper: layout plumbing + pallas_call
# ----------------------------------------------------------------------------
def fcn_multitask_forward(x_ncl, params, *, layers=(128, 256, 128),
                          kss=(7, 5, 3), tile_n=1):
    """Equivalent of FCNMultitask.forward(x) for NCL input x."""
    N, c_in, L = x_ncl.shape
    assert N % tile_n == 0, (N, tile_n)
    c1, c2, c3 = layers
    ks1, ks2, ks3 = kss
    c_out = params["wfc"].shape[1]
    bf = jnp.bfloat16

    # NCL -> NLC (channels on lanes) + tiny layer-1 im2col (K = ks1*c_in = 28).
    x = jnp.transpose(x_ncl, (0, 2, 1))
    pad1 = ks1 // 2
    xp = jnp.pad(x, ((0, 0), (pad1, pad1), (0, 0)))
    x1 = jnp.concatenate([xp[:, k:k + L, :] for k in range(ks1)],
                         axis=-1).astype(bf)                   # (N, L, ks1*c_in)
    k1 = ks1 * c_in

    # Pack conv weights (ks, C_in, C_out) -> (ks*C_in, C_out), cast to bf16.
    w1 = params["w1"].reshape(k1, c1).astype(bf)
    w2 = params["w2"].reshape(ks2 * c1, c2).astype(bf)
    w3 = params["w3"].reshape(ks3 * c2, c3).astype(bf)
    wfc = params["wfc"].astype(bf)

    grid = (N // tile_n,)

    def full(a):  # whole array resident in VMEM, fetched once (constant index)
        return pl.BlockSpec(a.shape, lambda n, _nd=a.ndim: (0,) * _nd)

    out = pl.pallas_call(
        functools.partial(fcn_fused_kernel, kss=kss),
        out_shape=jax.ShapeDtypeStruct((grid[0], tile_n, c_out), jnp.float32),
        grid_spec=pltpu.PrefetchScalarGridSpec(
            num_scalar_prefetch=0,
            grid=grid,
            in_specs=[
                pl.BlockSpec((tile_n, L, k1), lambda n: (n, 0, 0)),
                full(w1), full(params["s1"]), full(params["b1"]),
                full(w2), full(params["s2"]), full(params["b2"]),
                full(w3), full(params["s3"]), full(params["b3"]),
                full(wfc), full(params["bfc"]),
            ],
            out_specs=pl.BlockSpec((1, tile_n, c_out), lambda n: (n, 0, 0)),
            scratch_shapes=[
                pltpu.VMEM((tile_n, L, ks2 * c1), bf),   # packed taps, layer 2
                pltpu.VMEM((tile_n, L, ks3 * c2), bf),   # packed taps, layer 3
            ]),
        compiler_params=pltpu.CompilerParams(
            dimension_semantics=("parallel",),           # 2 TCs/chip on v7x
            vmem_limit_bytes=32 * 1024 * 1024),          # safe on v5e/v6e/v7x
    )(x1, w1, params["s1"], params["b1"],
      w2, params["s2"], params["b2"],
      w3, params["s3"], params["b3"],
      wfc, params["bfc"])
    return out.reshape(N, c_out)


# ----------------------------------------------------------------------------
# Deterministic parameter init (shapes follow FCNMultitask.__init__)
# ----------------------------------------------------------------------------
def init_params(key, c_in, c_out, layers=(128, 256, 128), kss=(7, 5, 3)):
    eps = 1e-5
    bn_scale = 1.0 / jnp.sqrt(1.0 + eps)  # gamma=1, beta=0, mean=0, var=1 (eval BN)
    params = {}
    for i, (ci, co, ks) in enumerate(
            zip((c_in,) + tuple(layers[:-1]), layers, kss), start=1):
        key, k1 = jax.random.split(key)
        # torch Conv1d weight (co, ci, ks) stored as (ks, ci, co)
        params[f"w{i}"] = (jax.random.normal(k1, (ks, ci, co), jnp.float32)
                           * (1.0 / jnp.sqrt(ci * ks)))
        params[f"s{i}"] = jnp.full((1, co), bn_scale, jnp.float32)
        params[f"b{i}"] = jnp.zeros((1, co), jnp.float32)
    key, k1, k2 = jax.random.split(key, 3)
    params["wfc"] = (jax.random.normal(k1, (layers[-1], c_out), jnp.float32)
                     * (1.0 / jnp.sqrt(layers[-1])))
    params["bfc"] = jax.random.normal(k2, (1, c_out), jnp.float32) * 0.01
    return params


# ----------------------------------------------------------------------------
# Pure-JAX reference (same math + same bf16 matmul-input precision)
# ----------------------------------------------------------------------------
def reference_forward(x_ncl, params, kss=(7, 5, 3)):
    bf = jnp.bfloat16
    x = jnp.transpose(x_ncl, (0, 2, 1)).astype(jnp.float32)
    for i, ks in enumerate(kss, start=1):
        pad = ks // 2
        L = x.shape[1]
        xp = jnp.pad(x, ((0, 0), (pad, pad), (0, 0)))
        xcat = jnp.concatenate([xp[:, k:k + L, :] for k in range(ks)], axis=-1)
        w = params[f"w{i}"]
        wp = w.reshape(w.shape[0] * w.shape[1], w.shape[2])
        acc = jax.lax.dot_general(
            xcat.astype(bf), wp.astype(bf),
            dimension_numbers=(((2,), (0,)), ((), ())),
            preferred_element_type=jnp.float32)
        x = jnp.maximum(acc * params[f"s{i}"][None] + params[f"b{i}"][None], 0.0)
    g = jnp.mean(x, axis=1)
    return (jnp.dot(g.astype(bf), params["wfc"].astype(bf),
                    preferred_element_type=jnp.float32) + params["bfc"])


if __name__ == "__main__":
    key = jax.random.PRNGKey(0)
    c_in, c_out, horizon = 4, 5, 8
    batch, seq = 2, 16

    key, kx, kp = jax.random.split(key, 3)
    x = jax.random.normal(kx, (batch, c_in, seq), jnp.float32)  # PyTorch NCL input
    params = init_params(kp, c_in, c_out)

    fwd = jax.jit(fcn_multitask_forward)
    out = jax.block_until_ready(fwd(x, params))
    ref = jax.block_until_ready(reference_forward(x, params))

    assert out.shape == (batch, c_out), out.shape
    assert jnp.allclose(out, ref, atol=1e-2, rtol=1e-2), (out, ref)
    print("KERNEL_OK")
</pallas_src>

<mosaic_0001>
module attributes {stable_mosaic.version = 11 : i64} {
  func.func @fcn_fused_kernel(%arg0: i32, %arg1: memref<1x16x28xbf16, #tpu.memory_space<vmem>>, %arg2: memref<28x128xbf16, #tpu.memory_space<vmem>>, %arg3: memref<1x128xf32, #tpu.memory_space<vmem>>, %arg4: memref<1x128xf32, #tpu.memory_space<vmem>>, %arg5: memref<640x256xbf16, #tpu.memory_space<vmem>>, %arg6: memref<1x256xf32, #tpu.memory_space<vmem>>, %arg7: memref<1x256xf32, #tpu.memory_space<vmem>>, %arg8: memref<768x128xbf16, #tpu.memory_space<vmem>>, %arg9: memref<1x128xf32, #tpu.memory_space<vmem>>, %arg10: memref<1x128xf32, #tpu.memory_space<vmem>>, %arg11: memref<128x5xbf16, #tpu.memory_space<vmem>>, %arg12: memref<1x5xf32, #tpu.memory_space<vmem>>, %arg13: memref<1x1x5xf32, #tpu.memory_space<vmem>>, %arg14: memref<1x16x640xbf16, #tpu.memory_space<vmem>>, %arg15: memref<1x16x768xbf16, #tpu.memory_space<vmem>>) attributes {dimension_semantics = [#tpu.dimension_semantics<parallel>], iteration_bounds = array<i64: 2>, scalar_prefetch = 0 : i64, scratch_operands = 2 : i64, tpu.core_type = #tpu.core_type<tc>, window_params = [{transform_indices = @transform_0, window_bounds = array<i64: 1, 16, 28>}, {pipeline_mode = #tpu.pipeline_mode<synchronous>, transform_indices = @transform_1, window_bounds = array<i64: 28, 128>}, {pipeline_mode = #tpu.pipeline_mode<synchronous>, transform_indices = @transform_2, window_bounds = array<i64: 1, 128>}, {pipeline_mode = #tpu.pipeline_mode<synchronous>, transform_indices = @transform_3, window_bounds = array<i64: 1, 128>}, {pipeline_mode = #tpu.pipeline_mode<synchronous>, transform_indices = @transform_4, window_bounds = array<i64: 640, 256>}, {pipeline_mode = #tpu.pipeline_mode<synchronous>, transform_indices = @transform_5, window_bounds = array<i64: 1, 256>}, {pipeline_mode = #tpu.pipeline_mode<synchronous>, transform_indices = @transform_6, window_bounds = array<i64: 1, 256>}, {pipeline_mode = #tpu.pipeline_mode<synchronous>, transform_indices = @transform_7, window_bounds = array<i64: 768, 128>}, {pipeline_mode = #tpu.pipeline_mode<synchronous>, transform_indices = @transform_8, window_bounds = array<i64: 1, 128>}, {pipeline_mode = #tpu.pipeline_mode<synchronous>, transform_indices = @transform_9, window_bounds = array<i64: 1, 128>}, {pipeline_mode = #tpu.pipeline_mode<synchronous>, transform_indices = @transform_10, window_bounds = array<i64: 128, 5>}, {pipeline_mode = #tpu.pipeline_mode<synchronous>, transform_indices = @transform_11, window_bounds = array<i64: 1, 5>}, {transform_indices = @transform_12, window_bounds = array<i64: 1, 1, 5>}]} {
    %c0 = arith.constant 0 : index
    %c0_0 = arith.constant 0 : index
    %c0_1 = arith.constant 0 : index
    %0 = vector.load %arg1[%c0, %c0_0, %c0_1] : memref<1x16x28xbf16, #tpu.memory_space<vmem>>, vector<1x16x28xbf16>
    %1 = vector.shape_cast %0 : vector<1x16x28xbf16> to vector<16x28xbf16>
    %c0_2 = arith.constant 0 : index
    %c0_3 = arith.constant 0 : index
    %2 = vector.load %arg2[%c0_2, %c0_3] : memref<28x128xbf16, #tpu.memory_space<vmem>>, vector<28x128xbf16>
    %cst = arith.constant dense<0.000000e+00> : vector<16x128xf32>
    %3 = tpu.matmul %1, %2, %cst {dimension_numbers = #tpu.dot_dimension_numbers<[1], [0], [0], [1], [0, 0, 1, 1], [], []>} : vector<16x28xbf16>, vector<28x128xbf16>, vector<16x128xf32> -> vector<16x128xf32>
    %c0_4 = arith.constant 0 : index
    %c0_5 = arith.constant 0 : index
    %4 = vector.load %arg3[%c0_4, %c0_5] : memref<1x128xf32, #tpu.memory_space<vmem>>, vector<1x128xf32>
    %5 = vector.broadcast %4 : vector<1x128xf32> to vector<16x128xf32>
    %6 = arith.mulf %3, %5 : vector<16x128xf32>
    %c0_6 = arith.constant 0 : index
    %c0_7 = arith.constant 0 : index
    %7 = vector.load %arg4[%c0_6, %c0_7] : memref<1x128xf32, #tpu.memory_space<vmem>>, vector<1x128xf32>
    %8 = vector.broadcast %7 : vector<1x128xf32> to vector<16x128xf32>
    %9 = arith.addf %6, %8 : vector<16x128xf32>
    %cst_8 = arith.constant 0.000000e+00 : f32
    %10 = vector.broadcast %cst_8 : f32 to vector<16x128xf32>
    %11 = arith.maximumf %9, %10 : vector<16x128xf32>
    %12 = vector.shape_cast %11 : vector<16x128xf32> to vector<1x16x128xf32>
    %13 = arith.truncf %12 : vector<1x16x128xf32> to vector<1x16x128xbf16>
    %cst_9 = arith.constant 0.000000e+00 : bf16
    %14 = vector.broadcast %cst_9 : bf16 to vector<1x2x128xbf16>
    %c0_10 = arith.constant 0 : index
    %c0_11 = arith.constant 0 : index
    %c0_12 = arith.constant 0 : index
    %15 = vector.load %arg14[%c0_10, %c0_11, %c0_12] : memref<1x16x640xbf16, #tpu.memory_space<vmem>>, vector<1x2x128xbf16>
    tpu.vector_store %arg14[%c0_10, %c0_11, %c0_12], %14 {strides = array<i32>} : memref<1x16x640xbf16, #tpu.memory_space<vmem>>, vector<1x2x128xbf16>,
    %16 = vector.extract_strided_slice %13 {offsets = [0, 0, 0], sizes = [1, 14, 128], strides = [1, 1, 1]} : vector<1x16x128xbf16> to vector<1x14x128xbf16>
    %c0_13 = arith.constant 0 : index
    %c2 = arith.constant 2 : index
    %c0_14 = arith.constant 0 : index
    %17 = vector.load %arg14[%c0_13, %c2, %c0_14] : memref<1x16x640xbf16, #tpu.memory_space<vmem>>, vector<1x14x128xbf16>
    tpu.vector_store %arg14[%c0_13, %c2, %c0_14], %16 {strides = array<i32>} : memref<1x16x640xbf16, #tpu.memory_space<vmem>>, vector<1x14x128xbf16>,
    %cst_15 = arith.constant 0.000000e+00 : bf16
    %18 = vector.broadcast %cst_15 : bf16 to vector<1x1x128xbf16>
    %c0_16 = arith.constant 0 : index
    %c0_17 = arith.constant 0 : index
    %c128 = arith.constant 128 : index
    %19 = vector.load %arg14[%c0_16, %c0_17, %c128] : memref<1x16x640xbf16, #tpu.memory_space<vmem>>, vector<1x1x128xbf16>
    tpu.vector_store %arg14[%c0_16, %c0_17, %c128], %18 {strides = array<i32>} : memref<1x16x640xbf16, #tpu.memory_space<vmem>>, vector<1x1x128xbf16>,
    %20 = vector.extract_strided_slice %13 {offsets = [0, 0, 0], sizes = [1, 15, 128], strides = [1, 1, 1]} : vector<1x16x128xbf16> to vector<1x15x128xbf16>
    %c0_18 = arith.constant 0 : index
    %c1 = arith.constant 1 : index
    %c128_19 = arith.constant 128 : index
    %21 = vector.load %arg14[%c0_18, %c1, %c128_19] : memref<1x16x640xbf16, #tpu.memory_space<vmem>>, vector<1x15x128xbf16>
    tpu.vector_store %arg14[%c0_18, %c1, %c128_19], %20 {strides = array<i32>} : memref<1x16x640xbf16, #tpu.memory_space<vmem>>, vector<1x15x128xbf16>,
    %c0_20 = arith.constant 0 : index
    %c0_21 = arith.constant 0 : index
    %c256 = arith.constant 256 : index
    %22 = vector.load %arg14[%c0_20, %c0_21, %c256] : memref<1x16x640xbf16, #tpu.memory_space<vmem>>, vector<1x16x128xbf16>
    tpu.vector_store %arg14[%c0_20, %c0_21, %c256], %13 {strides = array<i32>} : memref<1x16x640xbf16, #tpu.memory_space<vmem>>, vector<1x16x128xbf16>,
    %23 = vector.extract_strided_slice %13 {offsets = [0, 1, 0], sizes = [1, 15, 128], strides = [1, 1, 1]} : vector<1x16x128xbf16> to vector<1x15x128xbf16>
    %c0_22 = arith.constant 0 : index
    %c0_23 = arith.constant 0 : index
    %c384 = arith.constant 384 : index
    %24 = vector.load %arg14[%c0_22, %c0_23, %c384] : memref<1x16x640xbf16, #tpu.memory_space<vmem>>, vector<1x15x128xbf16>
    tpu.vector_store %arg14[%c0_22, %c0_23, %c384], %23 {strides = array<i32>} : memref<1x16x640xbf16, #tpu.memory_space<vmem>>, vector<1x15x128xbf16>,
    %cst_24 = arith.constant 0.000000e+00 : bf16
    %25 = vector.broadcast %cst_24 : bf16 to vector<1x1x128xbf16>
    %c0_25 = arith.constant 0 : index
    %c15 = arith.constant 15 : index
    %c384_26 = arith.constant 384 : index
    %26 = vector.load %arg14[%c0_25, %c15, %c384_26] : memref<1x16x640xbf16, #tpu.memory_space<vmem>>, vector<1x1x128xbf16>
    tpu.vector_store %arg14[%c0_25, %c15, %c384_26], %25 {strides = array<i32>} : memref<1x16x640xbf16, #tpu.memory_space<vmem>>, vector<1x1x128xbf16>,
    %27 = vector.extract_strided_slice %13 {offsets = [0, 2, 0], sizes = [1, 14, 128], strides = [1, 1, 1]} : vector<1x16x128xbf16> to vector<1x14x128xbf16>
    %c0_27 = arith.constant 0 : index
    %c0_28 = arith.constant 0 : index
    %c512 = arith.constant 512 : index
    %28 = vector.load %arg14[%c0_27, %c0_28, %c512] : memref<1x16x640xbf16, #tpu.memory_space<vmem>>, vector<1x14x128xbf16>
    tpu.vector_store %arg14[%c0_27, %c0_28, %c512], %27 {strides = array<i32>} : memref<1x16x640xbf16, #tpu.memory_space<vmem>>, vector<1x14x128xbf16>,
    %cst_29 = arith.constant 0.000000e+00 : bf16
    %29 = vector.broadcast %cst_29 : bf16 to vector<1x2x128xbf16>
    %c0_30 = arith.constant 0 : index
    %c14 = arith.constant 14 : index
    %c512_31 = arith.constant 512 : index
    %30 = vector.load %arg14[%c0_30, %c14, %c512_31] : memref<1x16x640xbf16, #tpu.memory_space<vmem>>, vector<1x2x128xbf16>
    tpu.vector_store %arg14[%c0_30, %c14, %c512_31], %29 {strides = array<i32>} : memref<1x16x640xbf16, #tpu.memory_space<vmem>>, vector<1x2x128xbf16>,
    %c0_32 = arith.constant 0 : index
    %c0_33 = arith.constant 0 : index
    %c0_34 = arith.constant 0 : index
    %31 = vector.load %arg14[%c0_32, %c0_33, %c0_34] : memref<1x16x640xbf16, #tpu.memory_space<vmem>>, vector<1x16x640xbf16>
    %32 = vector.shape_cast %31 : vector<1x16x640xbf16> to vector<16x640xbf16>
    %c0_35 = arith.constant 0 : index
    %c0_36 = arith.constant 0 : index
    %33 = vector.load %arg5[%c0_35, %c0_36] : memref<640x256xbf16, #tpu.memory_space<vmem>>, vector<640x256xbf16>
    %cst_37 = arith.constant dense<0.000000e+00> : vector<16x256xf32>
    %34 = tpu.matmul %32, %33, %cst_37 {dimension_numbers = #tpu.dot_dimension_numbers<[1], [0], [0], [1], [0, 0, 1, 1], [], []>} : vector<16x640xbf16>, vector<640x256xbf16>, vector<16x256xf32> -> vector<16x256xf32>
    %c0_38 = arith.constant 0 : index
    %c0_39 = arith.constant 0 : index
    %35 = vector.load %arg6[%c0_38, %c0_39] : memref<1x256xf32, #tpu.memory_space<vmem>>, vector<1x256xf32>
    %36 = vector.broadcast %35 : vector<1x256xf32> to vector<16x256xf32>
    %37 = arith.mulf %34, %36 : vector<16x256xf32>
    %c0_40 = arith.constant 0 : index
    %c0_41 = arith.constant 0 : index
    %38 = vector.load %arg7[%c0_40, %c0_41] : memref<1x256xf32, #tpu.memory_space<vmem>>, vector<1x256xf32>
    %39 = vector.broadcast %38 : vector<1x256xf32> to vector<16x256xf32>
    %40 = arith.addf %37, %39 : vector<16x256xf32>
    %cst_42 = arith.constant 0.000000e+00 : f32
    %41 = vector.broadcast %cst_42 : f32 to vector<16x256xf32>
    %42 = arith.maximumf %40, %41 : vector<16x256xf32>
    %43 = vector.shape_cast %42 : vector<16x256xf32> to vector<1x16x256xf32>
    %44 = arith.truncf %43 : vector<1x16x256xf32> to vector<1x16x256xbf16>
    %cst_43 = arith.constant 0.000000e+00 : bf16
    %45 = vector.broadcast %cst_43 : bf16 to vector<1x1x256xbf16>
    %c0_44 = arith.constant 0 : index
    %c0_45 = arith.constant 0 : index
    %c0_46 = arith.constant 0 : index
    %46 = vector.load %arg15[%c0_44, %c0_45, %c0_46] : memref<1x16x768xbf16, #tpu.memory_space<vmem>>, vector<1x1x256xbf16>
    tpu.vector_store %arg15[%c0_44, %c0_45, %c0_46], %45 {strides = array<i32>} : memref<1x16x768xbf16, #tpu.memory_space<vmem>>, vector<1x1x256xbf16>,
    %47 = vector.extract_strided_slice %44 {offsets = [0, 0, 0], sizes = [1, 15, 256], strides = [1, 1, 1]} : vector<1x16x256xbf16> to vector<1x15x256xbf16>
    %c0_47 = arith.constant 0 : index
    %c1_48 = arith.constant 1 : index
    %c0_49 = arith.constant 0 : index
    %48 = vector.load %arg15[%c0_47, %c1_48, %c0_49] : memref<1x16x768xbf16, #tpu.memory_space<vmem>>, vector<1x15x256xbf16>
    tpu.vector_store %arg15[%c0_47, %c1_48, %c0_49], %47 {strides = array<i32>} : memref<1x16x768xbf16, #tpu.memory_space<vmem>>, vector<1x15x256xbf16>,
    %c0_50 = arith.constant 0 : index
    %c0_51 = arith.constant 0 : index
    %c256_52 = arith.constant 256 : index
    %49 = vector.load %arg15[%c0_50, %c0_51, %c256_52] : memref<1x16x768xbf16, #tpu.memory_space<vmem>>, vector<1x16x256xbf16>
    tpu.vector_store %arg15[%c0_50, %c0_51, %c256_52], %44 {strides = array<i32>} : memref<1x16x768xbf16, #tpu.memory_space<vmem>>, vector<1x16x256xbf16>,
    %50 = vector.extract_strided_slice %44 {offsets = [0, 1, 0], sizes = [1, 15, 256], strides = [1, 1, 1]} : vector<1x16x256xbf16> to vector<1x15x256xbf16>
    %c0_53 = arith.constant 0 : index
    %c0_54 = arith.constant 0 : index
    %c512_55 = arith.constant 512 : index
    %51 = vector.load %arg15[%c0_53, %c0_54, %c512_55] : memref<1x16x768xbf16, #tpu.memory_space<vmem>>, vector<1x15x256xbf16>
    tpu.vector_store %arg15[%c0_53, %c0_54, %c512_55], %50 {strides = array<i32>} : memref<1x16x768xbf16, #tpu.memory_space<vmem>>, vector<1x15x256xbf16>,
    %cst_56 = arith.constant 0.000000e+00 : bf16
    %52 = vector.broadcast %cst_56 : bf16 to vector<1x1x256xbf16>
    %c0_57 = arith.constant 0 : index
    %c15_58 = arith.constant 15 : index
    %c512_59 = arith.constant 512 : index
    %53 = vector.load %arg15[%c0_57, %c15_58, %c512_59] : memref<1x16x768xbf16, #tpu.memory_space<vmem>>, vector<1x1x256xbf16>
    tpu.vector_store %arg15[%c0_57, %c15_58, %c512_59], %52 {strides = array<i32>} : memref<1x16x768xbf16, #tpu.memory_space<vmem>>, vector<1x1x256xbf16>,
    %c0_60 = arith.constant 0 : index
    %c0_61 = arith.constant 0 : index
    %c0_62 = arith.constant 0 : index
    %54 = vector.load %arg15[%c0_60, %c0_61, %c0_62] : memref<1x16x768xbf16, #tpu.memory_space<vmem>>, vector<1x16x768xbf16>
    %55 = vector.shape_cast %54 : vector<1x16x768xbf16> to vector<16x768xbf16>
    %c0_63 = arith.constant 0 : index
    %c0_64 = arith.constant 0 : index
    %56 = vector.load %arg8[%c0_63, %c0_64] : memref<768x128xbf16, #tpu.memory_space<vmem>>, vector<768x128xbf16>
    %cst_65 = arith.constant dense<0.000000e+00> : vector<16x128xf32>
    %57 = tpu.matmul %55, %56, %cst_65 {dimension_numbers = #tpu.dot_dimension_numbers<[1], [0], [0], [1], [0, 0, 1, 1], [], []>} : vector<16x768xbf16>, vector<768x128xbf16>, vector<16x128xf32> -> vector<16x128xf32>
    %c0_66 = arith.constant 0 : index
    %c0_67 = arith.constant 0 : index
    %58 = vector.load %arg9[%c0_66, %c0_67] : memref<1x128xf32, #tpu.memory_space<vmem>>, vector<1x128xf32>
    %59 = vector.broadcast %58 : vector<1x128xf32> to vector<16x128xf32>
    %60 = arith.mulf %57, %59 : vector<16x128xf32>
    %c0_68 = arith.constant 0 : index
    %c0_69 = arith.constant 0 : index
    %61 = vector.load %arg10[%c0_68, %c0_69] : memref<1x128xf32, #tpu.memory_space<vmem>>, vector<1x128xf32>
    %62 = vector.broadcast %61 : vector<1x128xf32> to vector<16x128xf32>
    %63 = arith.addf %60, %62 : vector<16x128xf32>
    %cst_70 = arith.constant 0.000000e+00 : f32
    %64 = vector.broadcast %cst_70 : f32 to vector<16x128xf32>
    %65 = arith.maximumf %63, %64 : vector<16x128xf32>
    %66 = vector.shape_cast %65 : vector<16x128xf32> to vector<1x16x128xf32>
    %cst_71 = arith.constant dense<0.000000e+00> : vector<1x128xf32>
    %67 = vector.multi_reduction <add>, %66, %cst_71 [1] : vector<1x16x128xf32> to vector<1x128xf32>
    %cst_72 = arith.constant 1.600000e+01 : f32
    %68 = vector.broadcast %cst_72 : f32 to vector<1x128xf32>
    %69 = arith.divf %67, %68 : vector<1x128xf32>
    %70 = arith.truncf %69 : vector<1x128xf32> to vector<1x128xbf16>
    %c0_73 = arith.constant 0 : index
    %c0_74 = arith.constant 0 : index
    %71 = vector.load %arg11[%c0_73, %c0_74] : memref<128x5xbf16, #tpu.memory_space<vmem>>, vector<128x5xbf16>
    %cst_75 = arith.constant dense<0.000000e+00> : vector<1x5xf32>
    %72 = tpu.matmul %70, %71, %cst_75 {dimension_numbers = #tpu.dot_dimension_numbers<[1], [0], [0], [1], [0, 0, 1, 1], [], []>} : vector<1x128xbf16>, vector<128x5xbf16>, vector<1x5xf32> -> vector<1x5xf32>
    %c0_76 = arith.constant 0 : index
    %c0_77 = arith.constant 0 : index
    %73 = vector.load %arg12[%c0_76, %c0_77] : memref<1x5xf32, #tpu.memory_space<vmem>>, vector<1x5xf32>
    %74 = arith.addf %72, %73 : vector<1x5xf32>
    %75 = vector.shape_cast %74 : vector<1x5xf32> to vector<1x1x5xf32>
    %c0_78 = arith.constant 0 : index
    %c0_79 = arith.constant 0 : index
    %c0_80 = arith.constant 0 : index
    %76 = vector.load %arg13[%c0_78, %c0_79, %c0_80] : memref<1x1x5xf32, #tpu.memory_space<vmem>>, vector<1x1x5xf32>
    tpu.vector_store %arg13[%c0_78, %c0_79, %c0_80], %75 {strides = array<i32>} : memref<1x1x5xf32, #tpu.memory_space<vmem>>, vector<1x1x5xf32>,
    return
  }
  func.func @transform_0(%arg0: i32) -> (i32, i32, i32) {
    %c0_i32 = arith.constant 0 : i32
    %c0_i32_0 = arith.constant 0 : i32
    %c0_i32_1 = arith.constant 0 : i32
    return %arg0, %c0_i32, %c0_i32_0 : i32, i32, i32
  }
  func.func @transform_1(%arg0: i32) -> (i32, i32) {
    %c0_i32 = arith.constant 0 : i32
    %c0_i32_0 = arith.constant 0 : i32
    %c0_i32_1 = arith.constant 0 : i32
    return %c0_i32, %c0_i32_0 : i32, i32
  }
  func.func @transform_2(%arg0: i32) -> (i32, i32) {
    %c0_i32 = arith.constant 0 : i32
    %c0_i32_0 = arith.constant 0 : i32
    %c0_i32_1 = arith.constant 0 : i32
    return %c0_i32, %c0_i32_0 : i32, i32
  }
  func.func @transform_3(%arg0: i32) -> (i32, i32) {
    %c0_i32 = arith.constant 0 : i32
    %c0_i32_0 = arith.constant 0 : i32
    %c0_i32_1 = arith.constant 0 : i32
    return %c0_i32, %c0_i32_0 : i32, i32
  }
  func.func @transform_4(%arg0: i32) -> (i32, i32) {
    %c0_i32 = arith.constant 0 : i32
    %c0_i32_0 = arith.constant 0 : i32
    %c0_i32_1 = arith.constant 0 : i32
    return %c0_i32, %c0_i32_0 : i32, i32
  }
  func.func @transform_5(%arg0: i32) -> (i32, i32) {
    %c0_i32 = arith.constant 0 : i32
    %c0_i32_0 = arith.constant 0 : i32
    %c0_i32_1 = arith.constant 0 : i32
    return %c0_i32, %c0_i32_0 : i32, i32
  }
  func.func @transform_6(%arg0: i32) -> (i32, i32) {
    %c0_i32 = arith.constant 0 : i32
    %c0_i32_0 = arith.constant 0 : i32
    %c0_i32_1 = arith.constant 0 : i32
    return %c0_i32, %c0_i32_0 : i32, i32
  }
  func.func @transform_7(%arg0: i32) -> (i32, i32) {
    %c0_i32 = arith.constant 0 : i32
    %c0_i32_0 = arith.constant 0 : i32
    %c0_i32_1 = arith.constant 0 : i32
    return %c0_i32, %c0_i32_0 : i32, i32
  }
  func.func @transform_8(%arg0: i32) -> (i32, i32) {
    %c0_i32 = arith.constant 0 : i32
    %c0_i32_0 = arith.constant 0 : i32
    %c0_i32_1 = arith.constant 0 : i32
    return %c0_i32, %c0_i32_0 : i32, i32
  }
  func.func @transform_9(%arg0: i32) -> (i32, i32) {
    %c0_i32 = arith.constant 0 : i32
    %c0_i32_0 = arith.constant 0 : i32
    %c0_i32_1 = arith.constant 0 : i32
    return %c0_i32, %c0_i32_0 : i32, i32
  }
  func.func @transform_10(%arg0: i32) -> (i32, i32) {
    %c0_i32 = arith.constant 0 : i32
    %c0_i32_0 = arith.constant 0 : i32
    %c0_i32_1 = arith.constant 0 : i32
    return %c0_i32, %c0_i32_0 : i32, i32
  }
  func.func @transform_11(%arg0: i32) -> (i32, i32) {
    %c0_i32 = arith.constant 0 : i32
    %c0_i32_0 = arith.constant 0 : i32
    %c0_i32_1 = arith.constant 0 : i32
    return %c0_i32, %c0_i32_0 : i32, i32
  }
  func.func @transform_12(%arg0: i32) -> (i32, i32, i32) {
    %c0_i32 = arith.constant 0 : i32
    %c0_i32_0 = arith.constant 0 : i32
    %c0_i32_1 = arith.constant 0 : i32
    return %arg0, %c0_i32, %c0_i32_0 : i32, i32, i32
  }
}

</mosaic_0001>

<llo_original>
// kernel: fcn_multitask_forward.1
$region0: #{fcn_multitask_forward.1}
  #allocation0 [shape = 'u32[]', space=smem, size = 0x4, offset = 0x4, fixed_abs, tag = 'smem constant byte address 0x4 - core index']
  #allocation1 [shape = 'u32[144,128]{1,0:T(1,128)}', space=vmem, size = 0x12000, scoped, tag = 'internal scratch']
  #allocation2 [shape = 'bf16[1,16,640]{2,1,0:T(8,128)(2,1)}', space=vmem, size = 0x5000, scoped, tag = 'scratch operand']
  #allocation3 [shape = 'bf16[1,16,768]{2,1,0:T(8,128)(2,1)}', space=vmem, size = 0x6000, scoped, tag = 'scratch operand']
  %s0 = inlined_call_operand.vmem [shape: bf16[2,16,28], index: 0, kind: input, shape index: {}]
  %s1 = inlined_call_operand.vmem [shape: bf16[28,128], index: 1, kind: input, shape index: {}]
  %s2 = inlined_call_operand.vmem [shape: f32[1,128], index: 2, kind: input, shape index: {}]
  %s3 = inlined_call_operand.vmem [shape: f32[1,128], index: 3, kind: input, shape index: {}]
  %s4 = inlined_call_operand.vmem [shape: bf16[640,256], index: 4, kind: input, shape index: {}]
  %s5 = inlined_call_operand.vmem [shape: f32[1,256], index: 5, kind: input, shape index: {}]
  %s6 = inlined_call_operand.vmem [shape: f32[1,256], index: 6, kind: input, shape index: {}]
  %s7 = inlined_call_operand.vmem [shape: bf16[768,128], index: 7, kind: input, shape index: {}]
  %s8 = inlined_call_operand.vmem [shape: f32[1,128], index: 8, kind: input, shape index: {}]
  %s9 = inlined_call_operand.vmem [shape: f32[1,128], index: 9, kind: input, shape index: {}]
  %s10 = inlined_call_operand.vmem [shape: bf16[128,5], index: 10, kind: input, shape index: {}]
  %s11 = inlined_call_operand.vmem [shape: f32[1,5], index: 11, kind: input, shape index: {}]
  %s12 = inlined_call_operand.hbm [shape: f32[2,1,5], index: 12, kind: output, shape index: {}]
  %s13 = sld [smem:[#allocation0]]
  $region81: #{fcn_multitask_forward.1} parent=0
    _
  %s15 = ssub.s32 1, %s13
  %s16 = scalar_select 0, %s15, %s13
  $region1: #{fcn_multitask_forward.1} parent=0
    #allocation4 [shape = 'u8[1024]{0}', space=vmem, size = 0x400, scoped, tag = 'output window, operand 0']
    #allocation5 [shape = 's32[2]{0}', space=sflag, size = 0x8, scoped, tag = 'scoped memory for fcn_multitask_forward.1']
    %17 = vsyncpa [#allocation5], 0
    %s18 = scalar_lea.sflag [#allocation5], 1
    %19 = vsyncpa %s18, 0
    loop: start=0, step=1, limit=4
    $region2: #{fcn_multitask_forward.1} parent=1 // loop_pre_header
      _
    $region3: #{fcn_multitask_forward.1} parent=1 // loop_header
      %s21 = sphi 0, %s25
      %p22 = scmp.ge.s32.totalorder %s21, 4
      %s31 = sphi 0, %s33
      %s34 = sphi 0, %s31
      %s35 = sphi 0, %s34
      %s51 = sphi 0, %s35
      %s55 = sphi 0, %s55
      %s57 = sphi 0, %s55
      %s58 = sphi 0, %s57
      %s72 = sphi 0, %s58
      %s76 = sphi 0, %s76
      %s78 = sphi 0, %s76
      %s79 = sphi 0, %s78
      %s93 = sphi 0, %s79
      %s97 = sphi 0, %s97
      %s99 = sphi 0, %s97
      %s100 = sphi 0, %s99
      %s114 = sphi 0, %s100
      %s118 = sphi 0, %s118
      %s120 = sphi 0, %s118
      %s121 = sphi 0, %s120
      %s135 = sphi 0, %s121
      %s139 = sphi 0, %s139
      %s141 = sphi 0, %s139
      %s142 = sphi 0, %s141
      %s156 = sphi 0, %s142
      %s160 = sphi 0, %s160
      %s162 = sphi 0, %s160
      %s163 = sphi 0, %s162
      %s177 = sphi 0, %s163
      %s181 = sphi 0, %s181
      %s183 = sphi 0, %s181
      %s184 = sphi 0, %s183
      %s198 = sphi 0, %s184
      %s202 = sphi 0, %s202
      %s204 = sphi 0, %s202
      %s205 = sphi 0, %s204
      %s219 = sphi 0, %s205
      %s223 = sphi 0, %s223
      %s225 = sphi 0, %s223
      %s226 = sphi 0, %s225
      %s240 = sphi 0, %s226
      %s244 = sphi 0, %s244
      %s246 = sphi 0, %s244
      %s247 = sphi 0, %s246
      %s261 = sphi 0, %s247
      %s265 = sphi 0, %s265
      %s267 = sphi 0, %s265
      %s268 = sphi 0, %s267
      %s282 = sphi 0, %s268
      %s288 = sphi 0, %s290
      %s291 = sphi 0, %s288
      %s292 = sphi 0, %s291
      %s308 = sphi 0, %s292
    $region4: #{fcn_multitask_forward.1} parent=1 // loop_header_branch
      %24 = sbr.rel (%p22) target = $region8
    $region5: #{fcn_multitask_forward.1} parent=1 // loop_body
      %s26 = ssub.s32 %s21, 1
      %s27 = ssub.s32 %s21, 2
      %s28 = sadd.s32 %s21, 1
      %s29 = ssub.s32 %s21, %s28
      %p30 = scmp.eq.s32.totalorder %s29, 0
      %s32 = sadd.s32 %s31, 1
      %s33 = scalar_select %p30, %s31, %s32
      %p36 = pneg %p30
      %p37 = scmp.eq.s32.totalorder %s21, 1
      %p38 = por %p36, %p37
      %p39 = scmp.ne.s32.totalorder %s31, %s34
      %p40 = scmp.eq.s32.totalorder %s21, 0
      %p41 = por %p39, %p40
      %p42 = scmp.ne.s32.totalorder %s31, %s34
      %p43 = scmp.eq.s32.totalorder %s26, 1
      %p44 = por %p42, %p43
      %p45 = scmp.ne.s32.totalorder %s34, %s35
      %p46 = scmp.eq.s32.totalorder %s26, 0
      %p47 = por %p45, %p46
      %p48 = scmp.ne.s32.totalorder %s34, %s35
      %p49 = scmp.eq.s32.totalorder %s27, 1
      %p50 = por %p48, %p49
      %p52 = scmp.ne.s32.totalorder %s35, %s51
      %p53 = scmp.eq.s32.totalorder %s27, 0
      %p54 = por %p52, %p53
      %s56 = sadd.s32 %s55, 1
      %p59 = scmp.eq.s32.totalorder %s21, 1
      %p60 = scmp.ne.s32.totalorder %s55, %s57
      %p61 = scmp.eq.s32.totalorder %s21, 0
      %p62 = por %p60, %p61
      %p63 = scmp.ne.s32.totalorder %s55, %s57
      %p64 = scmp.eq.s32.totalorder %s26, 1
      %p65 = por %p63, %p64
      %p66 = scmp.ne.s32.totalorder %s57, %s58
      %p67 = scmp.eq.s32.totalorder %s26, 0
      %p68 = por %p66, %p67
      %p69 = scmp.ne.s32.totalorder %s57, %s58
      %p70 = scmp.eq.s32.totalorder %s27, 1
      %p71 = por %p69, %p70
      %p73 = scmp.ne.s32.totalorder %s58, %s72
      %p74 = scmp.eq.s32.totalorder %s27, 0
      %p75 = por %p73, %p74
      %s77 = sadd.s32 %s76, 1
      %p80 = scmp.eq.s32.totalorder %s21, 1
      %p81 = scmp.ne.s32.totalorder %s76, %s78
      %p82 = scmp.eq.s32.totalorder %s21, 0
      %p83 = por %p81, %p82
      %p84 = scmp.ne.s32.totalorder %s76, %s78
      %p85 = scmp.eq.s32.totalorder %s26, 1
      %p86 = por %p84, %p85
      %p87 = scmp.ne.s32.totalorder %s78, %s79
      %p88 = scmp.eq.s32.totalorder %s26, 0
      %p89 = por %p87, %p88
      %p90 = scmp.ne.s32.totalorder %s78, %s79
      %p91 = scmp.eq.s32.totalorder %s27, 1
      %p92 = por %p90, %p91
      %p94 = scmp.ne.s32.totalorder %s79, %s93
      %p95 = scmp.eq.s32.totalorder %s27, 0
      %p96 = por %p94, %p95
      %s98 = sadd.s32 %s97, 1
      %p101 = scmp.eq.s32.totalorder %s21, 1
      %p102 = scmp.ne.s32.totalorder %s97, %s99
      %p103 = scmp.eq.s32.totalorder %s21, 0
      %p104 = por %p102, %p103
      %p105 = scmp.ne.s32.totalorder %s97, %s99
      %p106 = scmp.eq.s32.totalorder %s26, 1
      %p107 = por %p105, %p106
      %p108 = scmp.ne.s32.totalorder %s99, %s100
      %p109 = scmp.eq.s32.totalorder %s26, 0
      %p110 = por %p108, %p109
      %p111 = scmp.ne.s32.totalorder %s99, %s100
      %p112 = scmp.eq.s32.totalorder %s27, 1
      %p113 = por %p111, %p112
      %p115 = scmp.ne.s32.totalorder %s100, %s114
      %p116 = scmp.eq.s32.totalorder %s27, 0
      %p117 = por %p115, %p116
      %s119 = sadd.s32 %s118, 1
      %p122 = scmp.eq.s32.totalorder %s21, 1
      %p123 = scmp.ne.s32.totalorder %s118, %s120
      %p124 = scmp.eq.s32.totalorder %s21, 0
      %p125 = por %p123, %p124
      %p126 = scmp.ne.s32.totalorder %s118, %s120
      %p127 = scmp.eq.s32.totalorder %s26, 1
      %p128 = por %p126, %p127
      %p129 = scmp.ne.s32.totalorder %s120, %s121
      %p130 = scmp.eq.s32.totalorder %s26, 0
      %p131 = por %p129, %p130
      %p132 = scmp.ne.s32.totalorder %s120, %s121
      %p133 = scmp.eq.s32.totalorder %s27, 1
      %p134 = por %p132, %p133
      %p136 = scmp.ne.s32.totalorder %s121, %s135
      %p137 = scmp.eq.s32.totalorder %s27, 0
      %p138 = por %p136, %p137
      %s140 = sadd.s32 %s139, 1
      %p143 = scmp.eq.s32.totalorder %s21, 1
      %p144 = scmp.ne.s32.totalorder %s139, %s141
      %p145 = scmp.eq.s32.totalorder %s21, 0
      %p146 = por %p144, %p145
      %p147 = scmp.ne.s32.totalorder %s139, %s141
      %p148 = scmp.eq.s32.totalorder %s26, 1
      %p149 = por %p147, %p148
      %p150 = scmp.ne.s32.totalorder %s141, %s142
      %p151 = scmp.eq.s32.totalorder %s26, 0
      %p152 = por %p150, %p151
      %p153 = scmp.ne.s32.totalorder %s141, %s142
      %p154 = scmp.eq.s32.totalorder %s27, 1
      %p155 = por %p153, %p154
      %p157 = scmp.ne.s32.totalorder %s142, %s156
      %p158 = scmp.eq.s32.totalorder %s27, 0
      %p159 = por %p157, %p158
      %s161 = sadd.s32 %s160, 1
      %p164 = scmp.eq.s32.totalorder %s21, 1
      %p165 = scmp.ne.s32.totalorder %s160, %s162
      %p166 = scmp.eq.s32.totalorder %s21, 0
      %p167 = por %p165, %p166
      %p168 = scmp.ne.s32.totalorder %s160, %s162
      %p169 = scmp.eq.s32.totalorder %s26, 1
      %p170 = por %p168, %p169
      %p171 = scmp.ne.s32.totalorder %s162, %s163
      %p172 = scmp.eq.s32.totalorder %s26, 0
      %p173 = por %p171, %p172
      %p174 = scmp.ne.s32.totalorder %s162, %s163
      %p175 = scmp.eq.s32.totalorder %s27, 1
      %p176 = por %p174, %p175
      %p178 = scmp.ne.s32.totalorder %s163, %s177
      %p179 = scmp.eq.s32.totalorder %s27, 0
      %p180 = por %p178, %p179
      %s182 = sadd.s32 %s181, 1
      %p185 = scmp.eq.s32.totalorder %s21, 1
      %p186 = scmp.ne.s32.totalorder %s181, %s183
      %p187 = scmp.eq.s32.totalorder %s21, 0
      %p188 = por %p186, %p187
      %p189 = scmp.ne.s32.totalorder %s181, %s183
      %p190 = scmp.eq.s32.totalorder %s26, 1
      %p191 = por %p189, %p190
      %p192 = scmp.ne.s32.totalorder %s183, %s184
      %p193 = scmp.eq.s32.totalorder %s26, 0
      %p194 = por %p192, %p193
      %p195 = scmp.ne.s32.totalorder %s183, %s184
      %p196 = scmp.eq.s32.totalorder %s27, 1
      %p197 = por %p195, %p196
      %p199 = scmp.ne.s32.totalorder %s184, %s198
      %p200 = scmp.eq.s32.totalorder %s27, 0
      %p201 = por %p199, %p200
      %s203 = sadd.s32 %s202, 1
      %p206 = scmp.eq.s32.totalorder %s21, 1
      %p207 = scmp.ne.s32.totalorder %s202, %s204
      %p208 = scmp.eq.s32.totalorder %s21, 0
      %p209 = por %p207, %p208
      %p210 = scmp.ne.s32.totalorder %s202, %s204
      %p211 = scmp.eq.s32.totalorder %s26, 1
      %p212 = por %p210, %p211
      %p213 = scmp.ne.s32.totalorder %s204, %s205
      %p214 = scmp.eq.s32.totalorder %s26, 0
      %p215 = por %p213, %p214
      %p216 = scmp.ne.s32.totalorder %s204, %s205
      %p217 = scmp.eq.s32.totalorder %s27, 1
      %p218 = por %p216, %p217
      %p220 = scmp.ne.s32.totalorder %s205, %s219
      %p221 = scmp.eq.s32.totalorder %s27, 0
      %p222 = por %p220, %p221
      %s224 = sadd.s32 %s223, 1
      %p227 = scmp.eq.s32.totalorder %s21, 1
      %p228 = scmp.ne.s32.totalorder %s223, %s225
      %p229 = scmp.eq.s32.totalorder %s21, 0
      %p230 = por %p228, %p229
      %p231 = scmp.ne.s32.totalorder %s223, %s225
      %p232 = scmp.eq.s32.totalorder %s26, 1
      %p233 = por %p231, %p232
      %p234 = scmp.ne.s32.totalorder %s225, %s226
      %p235 = scmp.eq.s32.totalorder %s26, 0
      %p236 = por %p234, %p235
      %p237 = scmp.ne.s32.totalorder %s225, %s226
      %p238 = scmp.eq.s32.totalorder %s27, 1
      %p239 = por %p237, %p238
      %p241 = scmp.ne.s32.totalorder %s226, %s240
      %p242 = scmp.eq.s32.totalorder %s27, 0
      %p243 = por %p241, %p242
      %s245 = sadd.s32 %s244, 1
      %p248 = scmp.eq.s32.totalorder %s21, 1
      %p249 = scmp.ne.s32.totalorder %s244, %s246
      %p250 = scmp.eq.s32.totalorder %s21, 0
      %p251 = por %p249, %p250
      %p252 = scmp.ne.s32.totalorder %s244, %s246
      %p253 = scmp.eq.s32.totalorder %s26, 1
      %p254 = por %p252, %p253
      %p255 = scmp.ne.s32.totalorder %s246, %s247
      %p256 = scmp.eq.s32.totalorder %s26, 0
      %p257 = por %p255, %p256
      %p258 = scmp.ne.s32.totalorder %s246, %s247
      %p259 = scmp.eq.s32.totalorder %s27, 1
      %p260 = por %p258, %p259
      %p262 = scmp.ne.s32.totalorder %s247, %s261
      %p263 = scmp.eq.s32.totalorder %s27, 0
      %p264 = por %p262, %p263
      %s266 = sadd.s32 %s265, 1
      %p269 = scmp.eq.s32.totalorder %s21, 1
      %p270 = scmp.ne.s32.totalorder %s265, %s267
      %p271 = scmp.eq.s32.totalorder %s21, 0
      %p272 = por %p270, %p271
      %p273 = scmp.ne.s32.totalorder %s265, %s267
      %p274 = scmp.eq.s32.totalorder %s26, 1
      %p275 = por %p273, %p274
      %p276 = scmp.ne.s32.totalorder %s267, %s268
      %p277 = scmp.eq.s32.totalorder %s26, 0
      %p278 = por %p276, %p277
      %p279 = scmp.ne.s32.totalorder %s267, %s268
      %p280 = scmp.eq.s32.totalorder %s27, 1
      %p281 = por %p279, %p280
      %p283 = scmp.ne.s32.totalorder %s268, %s282
      %p284 = scmp.eq.s32.totalorder %s27, 0
      %p285 = por %p283, %p284
      %s286 = ssub.s32 %s21, %s28
      %p287 = scmp.eq.s32.totalorder %s286, 0
      %s289 = sadd.s32 %s288, 1
      %s290 = scalar_select %p287, %s288, %s289
      %p293 = pneg %p287
      %p294 = scmp.eq.s32.totalorder %s21, 1
      %p295 = por %p293, %p294
      %p296 = scmp.ne.s32.totalorder %s288, %s291
      %p297 = scmp.eq.s32.totalorder %s21, 0
      %p298 = por %p296, %p297
      %p299 = scmp.ne.s32.totalorder %s288, %s291
      %p300 = scmp.eq.s32.totalorder %s26, 1
      %p301 = por %p299, %p300
      %p302 = scmp.ne.s32.totalorder %s291, %s292
      %p303 = scmp.eq.s32.totalorder %s26, 0
      %p304 = por %p302, %p303
      %p305 = scmp.ne.s32.totalorder %s291, %s292
      %p306 = scmp.eq.s32.totalorder %s27, 1
      %p307 = por %p305, %p306
      %p309 = scmp.ne.s32.totalorder %s292, %s308
      %p310 = scmp.eq.s32.totalorder %s27, 0
      %p311 = por %p309, %p310
      %p312 = scmp.le.s32.totalorder 1, %s21
      %p313 = scmp.lt.s32.totalorder %s21, 3
      %p314 = pnand %p312, %p313
      %p315 = pneg %p314
      // Predicated region
      $region9: #{fcn_multitask_forward.1} parent=5 // pred_check
        _
      $region10: #{fcn_multitask_forward.1} parent=5 // pred_check_branch
        %317 = sbr.rel (%p314) target = $region12
      $region11: #{fcn_multitask_forward.1} parent=5 // pred_region
        %s318 = ssub.s32 %s21, 1
        // Predicated region
        $region13: #{fcn_multitask_forward.1} parent=11 // pred_check
          %p319 = pneg %p68
        $region14: #{fcn_multitask_forward.1} parent=11 // pred_check_branch
          %321 = sbr.rel (%p319) target = $region16
        $region15: #{fcn_multitask_forward.1} parent=11 // pred_region
          _
        $region16: #{fcn_multitask_forward.1} parent=11 // pred_fallthru
          _
        // Predicated region
        $region17: #{fcn_multitask_forward.1} parent=11 // pred_check
          %p322 = pneg %p89
        $region18: #{fcn_multitask_forward.1} parent=11 // pred_check_branch
          %324 = sbr.rel (%p322) target = $region20
        $region19: #{fcn_multitask_forward.1} parent=11 // pred_region
          _
        $region20: #{fcn_multitask_forward.1} parent=11 // pred_fallthru
          _
        // Predicated region
        $region21: #{fcn_multitask_forward.1} parent=11 // pred_check
          %p325 = pneg %p110
        $region22: #{fcn_multitask_forward.1} parent=11 // pred_check_branch
          %327 = sbr.rel (%p325) target = $region24
        $region23: #{fcn_multitask_forward.1} parent=11 // pred_region
          _
        $region24: #{fcn_multitask_forward.1} parent=11 // pred_fallthru
          _
        // Predicated region
        $region25: #{fcn_multitask_forward.1} parent=11 // pred_check
          %p328 = pneg %p131
        $region26: #{fcn_multitask_forward.1} parent=11 // pred_check_branch
          %330 = sbr.rel (%p328) target = $region28
        $region27: #{fcn_multitask_forward.1} parent=11 // pred_region
          _
        $region28: #{fcn_multitask_forward.1} parent=11 // pred_fallthru
          _
        // Predicated region
        $region29: #{fcn_multitask_forward.1} parent=11 // pred_check
          %p331 = pneg %p152
        $region30: #{fcn_multitask_forward.1} parent=11 // pred_check_branch
          %333 = sbr.rel (%p331) target = $region32
        $region31: #{fcn_multitask_forward.1} parent=11 // pred_region
          _
        $region32: #{fcn_multitask_forward.1} parent=11 // pred_fallthru
          _
        // Predicated region
        $region33: #{fcn_multitask_forward.1} parent=11 // pred_check
          %p334 = pneg %p173
        $region34: #{fcn_multitask_forward.1} parent=11 // pred_check_branch
          %336 = sbr.rel (%p334) target = $region36
        $region35: #{fcn_multitask_forward.1} parent=11 // pred_region
          _
        $region36: #{fcn_multitask_forward.1} parent=11 // pred_fallthru
          _
        // Predicated region
        $region37: #{fcn_multitask_forward.1} parent=11 // pred_check
          %p337 = pneg %p194
        $region38: #{fcn_multitask_forward.1} parent=11 // pred_check_branch
          %339 = sbr.rel (%p337) target = $region40
        $region39: #{fcn_multitask_forward.1} parent=11 // pred_region
          _
        $region40: #{fcn_multitask_forward.1} parent=11 // pred_fallthru
          _
        // Predicated region
        $region41: #{fcn_multitask_forward.1} parent=11 // pred_check
          %p340 = pneg %p215
        $region42: #{fcn_multitask_forward.1} parent=11 // pred_check_branch
          %342 = sbr.rel (%p340) target = $region44
        $region43: #{fcn_multitask_forward.1} parent=11 // pred_region
          _
        $region44: #{fcn_multitask_forward.1} parent=11 // pred_fallthru
          _
        // Predicated region
        $region45: #{fcn_multitask_forward.1} parent=11 // pred_check
          %p343 = pneg %p236
        $region46: #{fcn_multitask_forward.1} parent=11 // pred_check_branch
          %345 = sbr.rel (%p343) target = $region48
        $region47: #{fcn_multitask_forward.1} parent=11 // pred_region
          _
        $region48: #{fcn_multitask_forward.1} parent=11 // pred_fallthru
          _
        // Predicated region
        $region49: #{fcn_multitask_forward.1} parent=11 // pred_check
          %p346 = pneg %p257
        $region50: #{fcn_multitask_forward.1} parent=11 // pred_check_branch
          %348 = sbr.rel (%p346) target = $region52
        $region51: #{fcn_multitask_forward.1} parent=11 // pred_region
          _
        $region52: #{fcn_multitask_forward.1} parent=11 // pred_fallthru
          _
        // Predicated region
        $region53: #{fcn_multitask_forward.1} parent=11 // pred_check
          %p349 = pneg %p278
        $region54: #{fcn_multitask_forward.1} parent=11 // pred_check_branch
          %351 = sbr.rel (%p349) target = $region56
        $region55: #{fcn_multitask_forward.1} parent=11 // pred_region
          _
        $region56: #{fcn_multitask_forward.1} parent=11 // pred_fallthru
          _
      $region12: #{fcn_multitask_forward.1} parent=5 // pred_fallthru
        _
      %p352 = scmp.lt.s32.totalorder %s21, 2
      // Predicated region
      $region57: #{fcn_multitask_forward.1} parent=5 // pred_check
        %p353 = pneg %p352
      $region58: #{fcn_multitask_forward.1} parent=5 // pred_check_branch
        %355 = sbr.rel (%p353) target = $region60
      $region59: #{fcn_multitask_forward.1} parent=5 // pred_region
        // Predicated region
        $region61: #{fcn_multitask_forward.1} parent=59 // pred_check
          %p356 = pneg %p41
        $region62: #{fcn_multitask_forward.1} parent=59 // pred_check_branch
          %358 = sbr.rel (%p356) target = $region64
        $region63: #{fcn_multitask_forward.1} parent=59 // pred_region
          %p359 = scmp.lt.s32.totalorder %s21, 1
          %s360 = scalar_select %p359, %s21, 1
          %s361 = smul.addr %s360, 2
          %s362 = smul.addr %s361, 4
          %s363 = scalar_lea.vmem %s0, %s362
        $region64: #{fcn_multitask_forward.1} parent=59 // pred_fallthru
          _
      $region60: #{fcn_multitask_forward.1} parent=5 // pred_fallthru
        _
      %p364 = scmp.le.s32.totalorder 1, %s21
      %p365 = scmp.lt.s32.totalorder %s21, 3
      %p366 = pnand %p364, %p365
      %p367 = pneg %p366
      // Predicated region
      $region65: #{fcn_multitask_forward.1} parent=5 // pred_check
        _
      $region66: #{fcn_multitask_forward.1} parent=5 // pred_check_branch
        %369 = sbr.rel (%p366) target = $region68
      $region67: #{fcn_multitask_forward.1} parent=5 // pred_region
        %s370 = ssub.s32 %s21, 1
        %p371 = scmp.lt.s32.totalorder %s26, 1
        %s372 = scalar_select %p371, %s26, 1
        %s373 = smul.addr %s372, 2
        %s374 = smul.addr %s373, 4
        %s375 = scalar_lea.vmem %s0, %s374
        %p376 = pneg %p47
        %p377 = pneg %p44
        %p378 = pneg %p68
        %p379 = pneg %p65
        %p380 = pneg %p89
        %p381 = pneg %p86
        %p382 = pneg %p110
        %p383 = pneg %p107
        %p384 = pneg %p131
        %p385 = pneg %p128
        %p386 = pneg %p152
        %p387 = pneg %p149
        %p388 = pneg %p173
        %p389 = pneg %p170
        %p390 = pneg %p194
        %p391 = pneg %p191
        %p392 = pneg %p215
        %p393 = pneg %p212
        %p394 = pneg %p236
        %p395 = pneg %p233
        %p396 = pneg %p257
        %p397 = pneg %p254
        %p398 = pneg %p278
        %p399 = pneg %p275
        %p400 = pneg %p304
        %p401 = pneg %p301
        %s402 = sand.u32 %s291, 1
        %s403 = scalar_lea.sflag [#allocation5], %s402
        %s404 = sand.u32 %s291, 1
        %s405 = scalar_lea.vmem [#allocation4], %s404
        %p406 = scmp.lt.s32.totalorder %s26, 1
        %s407 = scalar_select %p406, %s26, 1
        %s408 = smul.addr %s407, 2
        %s409 = smul.addr %s408, 4
        %s410 = scalar_lea.vmem %s0, %s409
        %v412 = vld [vmem:[%s410] sm:$0xf]
        %v413 = vld [vmem:[%s410 + $0x4] sm:$0xf]
        %v414 = vld [vmem:[%s1] sm:$0xf]
        %v415 = vld [vmem:[%s1 + $0x4] sm:$0xf]
        %v416 = vld [vmem:[%s1 + $0x8] sm:$0xf]
        %v417 = vld [vmem:[%s1 + $0xc] sm:$0x3]
        %v420 = vunpack.c.l.b16 %v412
        %v421 = vunpack.c.l.b16 %v413
        %v422 = vpack.c.b16 %v421, %v420
        %v427 = vunpack.c.l.b16 %v414
        %v428 = vunpack.c.l.b16 %v415
        %v429 = vunpack.c.l.b16 %v416
        %v430 = vunpack.c.l.b16 %v417
        %v431 = vpack.c.b16 %v428, %v427
        %v432 = vpack.c.b16 %v430, %v429
        %vm434 = vcmask 228352
        %v436 = vsel %vm434, %v422, 0
        %vm438 = vcmask 1045504
        %v440 = vsel %vm438, %v432, 0
        %442 = vmatprep.subr.bf16.mxu0 0
        %443 = vmatpush1.bf16.msra.mxu0 0
        %444 = vmatprep.subr.bf16.mxu0 0
        %445 = vmatpush1.bf16.msra.mxu0 0
        %446 = vmatprep.subr.bf16.mxu0 0
        %447 = vmatpush1.bf16.msra.mxu0 0
        %448 = vmatprep.subr.bf16.mxu0 0
        %449 = vmatpush1.bf16.msra.mxu0 0
        %450 = vmatprep.subr.bf16.mxu0 0
        %451 = vmatpush1.bf16.msra.mxu0 0
        %452 = vmatprep.subr.bf16.mxu0 0
        %453 = vmatpush1.bf16.msra.mxu0 0
        %454 = vmatprep.subr.bf16.mxu0 0
        %455 = vmatpush1.bf16.msra.mxu0 %v440
        %456 = vmatprep.subr.bf16.mxu0 0
        %457 = vmatpush1.bf16.msra.mxu0 %v431
        %458 = vmatprep.subr.bf16.mxu0 0
        %459 = vmatpush2.bf16.msra.mxu0 0
        %460 = vmatprep.subr.bf16.mxu0 0
        %461 = vmatpush2.bf16.msra.mxu0 0
        %462 = vmatprep.subr.bf16.mxu0 0
        %463 = vmatpush2.bf16.msra.mxu0 0
        %464 = vmatprep.subr.bf16.mxu0 0
        %465 = vmatpush2.bf16.msra.mxu0 0
        %466 = vmatprep.subr.bf16.mxu0 0
        %467 = vmatpush2.bf16.msra.mxu0 0
        %468 = vmatprep.subr.bf16.mxu0 0
        %469 = vmatpush2.bf16.msra.mxu0 0
        %470 = vmatprep.subr.bf16.mxu0 0
        %471 = vmatpush2.bf16.msra.mxu0 0
        %472 = vmatprep.subr.bf16.mxu0 0
        %473 = vmatpush2.bf16.msra.mxu0 0
        %474 = vmatprep.mubr.bf16.mxu0 0
        %475 = vmatmul.mubr.bf16.gmra.mxu0 %v436
        %v476 = vpop.f32.mrf.mxu0
        %v477 = vadd.f32 0.0, %v476
        %v478 = vpop.f32.mrf.mxu0
        %v479 = vpop.f32.mrf.mxu0
        %v480 = vadd.f32 0.0, %v479
        %v481 = vpop.f32.mrf.mxu0
        %482 = vdwg.mxu0
        %v483 = vld [vmem:[%s2] sm:$0x1]
        %v485 = vlaneseq
        %v486 = vshrl.u32 %v485, 7
        %v487 = vsub.s32 0, %v486
        %v488 = vrot.slane %v483, %v487
        %v490 = vmul.f32 %v477, %v488
        %v491 = vmul.f32 %v480, %v488
        %v492 = vld [vmem:[%s3] sm:$0x1]
        %v494 = vlaneseq
        %v495 = vshrl.u32 %v494, 7
        %v496 = vsub.s32 0, %v495
        %v497 = vrot.slane %v492, %v496
        %v499 = vadd.f32 %v490, %v497
        %v500 = vadd.f32 %v491, %v497
        %v501 = vmax.f32 %v499, 0.0
        %v502 = vmax.f32 %v500, 0.0
        %v503 = vpack.c.bf16 %v502, %v501
        %504 = vst [vmem:[#allocation2] sm:$0x1] 0
        %v506 = vunpack.c.l.b16 %v503
        %v507 = vunpack.c.h.b16 %v503
        %v508 = vpack.c.b16 %v506, %v506
        %v509 = vpack.c.b16 %v507, %v507
        %vm510 = vcmask 1040384
        %vm511 = vcmask 1044484
        %vm512 = vmor %vm510, %vm511
        %v513 = vrot.slane %v508, 7
        %v514 = vrot.slane %v513, 4
        %v515 = vrot.slane %v509, 7
        %v516 = vsel %vm512, %v514, %v515
        %519 = vst [vmem:[#allocation2] sm:$0xe] %v513
        %520 = vst [vmem:[#allocation2 + $0x14] sm:$0xf] %v516
        %vm521 = vsmask.f32 256
        %vm522 = vmand %vm510, %vm521
        %v523 = vld [vmem:[#allocation2 + $0x4] sm:$0x1]
        %v524 = vsel %vm522, 0, %v523
        %525 = vst [vmem:[#allocation2 + $0x4] sm:$0x1] %v524
        %vm526 = vsmask.f32 4368
        %vm527 = vmor %vm521, %vm526
        %v529 = vshrl.u32 %v508, 16
        %v531 = vrot.slane %v529, 7
        %v532 = vshll.u32 %v508, 16
        %v534 = vor.u32 %v531, %v532
        %v535 = vrot.slane %v531, 4
        %v537 = vshrl.u32 %v509, 16
        %v539 = vrot.slane %v537, 7
        %v540 = vshll.u32 %v509, 16
        %v542 = vor.u32 %v539, %v540
        %v543 = vsel %vm527, %v535, %v542
        %vm546 = vcmask 1043456
        %vm547 = vsmask.f32 7938
        %vm548 = vmand %vm546, %vm547
        %v549 = vld [vmem:[#allocation2 + $0x4] sm:$0xf]
        %v550 = vsel %vm548, %v534, %v549
        %551 = vst [vmem:[#allocation2 + $0x4] sm:$0xf] %v550
        %552 = vst [vmem:[#allocation2 + $0x18] sm:$0xf] %v543
        %555 = vst [vmem:[#allocation2 + $0x8] sm:$0xf] %v508
        %556 = vst [vmem:[#allocation2 + $0x1c] sm:$0xf] %v509
        %vm557 = vsmask.f32 3328
        %vm558 = vsmask.f32 7440
        %vm559 = vmor %vm557, %vm558
        %v560 = vrot.slane %v529, 4
        %v561 = vrot.slane %v532, 5
        %v562 = vor.u32 %v560, %v561
        %v563 = vrot.slane %v562, 4
        %v564 = vrot.slane %v540, 5
        %v565 = vsel %vm559, %v563, %v564
        %v566 = vrot.slane %v537, 4
        %v567 = vor.u32 %v566, %v564
        %v568 = vrot.slane %v567, 4
        %571 = vst [vmem:[#allocation2 + $0xc] sm:$0xf] %v565
        %vm572 = vmand %vm546, %vm557
        %v573 = vld [vmem:[#allocation2 + $0x20] sm:$0xf]
        %v574 = vsel %vm572, %v568, %v573
        %575 = vst [vmem:[#allocation2 + $0x20] sm:$0xf] %v574
        %vm576 = vcmask 1043459
        %vm577 = vsmask.f32 7950
        %vm578 = vmand %vm576, %vm577
        %v579 = vld [vmem:[#allocation2 + $0x20] sm:$0x8]
        %v580 = vsel %vm578, 0, %v579
        %581 = vst [vmem:[#allocation2 + $0x20] sm:$0x8] %v580
        %vm582 = vcmask 1042432
        %vm583 = vcmask 1046532
        %vm584 = vmor %vm582, %vm583
        %v585 = vrot.slane %v508, 5
        %v586 = vrot.slane %v585, 4
        %v587 = vrot.slane %v509, 5
        %v588 = vsel %vm584, %v586, %v587
        %v589 = vrot.slane %v587, 4
        %592 = vst [vmem:[#allocation2 + $0x10] sm:$0xf] %v588
        %593 = vst [vmem:[#allocation2 + $0x24] sm:$0x7] %v589
        %594 = vst [vmem:[#allocation2 + $0x24] sm:$0x8] 0
        %v595 = vld [vmem:[#allocation2] sm:$0xff]
        %v596 = vld [vmem:[#allocation2 + $0x8] sm:$0xff]
        %v597 = vld [vmem:[#allocation2 + $0x10] sm:$0xf]
        %v598 = vld [vmem:[#allocation2 + $0x14] sm:$0xff]
        %v599 = vld [vmem:[#allocation2 + $0x1c] sm:$0xff]
        %v600 = vld [vmem:[#allocation2 + $0x24] sm:$0xf]
        %v601 = vld [vmem:[%s4] sm:$0xff]
        %v602 = vld [vmem:[%s4 + $0x8] sm:$0xff]
        %v603 = vld [vmem:[%s4 + $0x10] sm:$0xff]
        %v604 = vld [vmem:[%s4 + $0x18] sm:$0xff]
        %v605 = vld [vmem:[%s4 + $0x20] sm:$0xff]
        %v606 = vld [vmem:[%s4 + $0x28] sm:$0xff]
        %v607 = vld [vmem:[%s4 + $0x30] sm:$0xff]
        %v608 = vld [vmem:[%s4 + $0x38] sm:$0xff]
        %v609 = vld [vmem:[%s4 + $0x40] sm:$0xff]
        %v610 = vld [vmem:[%s4 + $0x48] sm:$0xff]
        %v611 = vld [vmem:[%s4 + $0x50] sm:$0xff]
        %v612 = vld [vmem:[%s4 + $0x58] sm:$0xff]
        %v613 = vld [vmem:[%s4 + $0x60] sm:$0xff]
        %v614 = vld [vmem:[%s4 + $0x68] sm:$0xff]
        %v615 = vld [vmem:[%s4 + $0x70] sm:$0xff]
        %v616 = vld [vmem:[%s4 + $0x78] sm:$0xff]
        %v617 = vld [vmem:[%s4 + $0x80] sm:$0xff]
        %v618 = vld [vmem:[%s4 + $0x88] sm:$0xff]
        %v619 = vld [vmem:[%s4 + $0x90] sm:$0xff]
        %v620 = vld [vmem:[%s4 + $0x98] sm:$0xff]
        %v621 = vld [vmem:[%s4 + $0xa0] sm:$0xff]
        %v622 = vld [vmem:[%s4 + $0xa8] sm:$0xff]
        %v623 = vld [vmem:[%s4 + $0xb0] sm:$0xff]
        %v624 = vld [vmem:[%s4 + $0xb8] sm:$0xff]
        %v625 = vld [vmem:[%s4 + $0xc0] sm:$0xff]
        %v626 = vld [vmem:[%s4 + $0xc8] sm:$0xff]
        %v627 = vld [vmem:[%s4 + $0xd0] sm:$0xff]
        %v628 = vld [vmem:[%s4 + $0xd8] sm:$0xff]
        %v629 = vld [vmem:[%s4 + $0xe0] sm:$0xff]
        %v630 = vld [vmem:[%s4 + $0xe8] sm:$0xff]
        %v631 = vld [vmem:[%s4 + $0xf0] sm:$0xff]
        %v632 = vld [vmem:[%s4 + $0xf8] sm:$0xff]
        %v633 = vld [vmem:[%s4 + $0x100] sm:$0xff]
        %v634 = vld [vmem:[%s4 + $0x108] sm:$0xff]
        %v635 = vld [vmem:[%s4 + $0x110] sm:$0xff]
        %v636 = vld [vmem:[%s4 + $0x118] sm:$0xff]
        %v637 = vld [vmem:[%s4 + $0x120] sm:$0xff]
        %v638 = vld [vmem:[%s4 + $0x128] sm:$0xff]
        %v639 = vld [vmem:[%s4 + $0x130] sm:$0xff]
        %v640 = vld [vmem:[%s4 + $0x138] sm:$0xff]
        %v641 = vld [vmem:[%s4 + $0x140] sm:$0xff]
        %v642 = vld [vmem:[%s4 + $0x148] sm:$0xff]
        %v643 = vld [vmem:[%s4 + $0x150] sm:$0xff]
        %v644 = vld [vmem:[%s4 + $0x158] sm:$0xff]
        %v645 = vld [vmem:[%s4 + $0x160] sm:$0xff]
        %v646 = vld [vmem:[%s4 + $0x168] sm:$0xff]
        %v647 = vld [vmem:[%s4 + $0x170] sm:$0xff]
        %v648 = vld [vmem:[%s4 + $0x178] sm:$0xff]
        %v649 = vld [vmem:[%s4 + $0x180] sm:$0xff]
        %v650 = vld [vmem:[%s4 + $0x188] sm:$0xff]
        %v651 = vld [vmem:[%s4 + $0x190] sm:$0xff]
        %v652 = vld [vmem:[%s4 + $0x198] sm:$0xff]
        %v653 = vld [vmem:[%s4 + $0x1a0] sm:$0xff]
        %v654 = vld [vmem:[%s4 + $0x1a8] sm:$0xff]
        %v655 = vld [vmem:[%s4 + $0x1b0] sm:$0xff]
        %v656 = vld [vmem:[%s4 + $0x1b8] sm:$0xff]
        %v657 = vld [vmem:[%s4 + $0x1c0] sm:$0xff]
        %v658 = vld [vmem:[%s4 + $0x1c8] sm:$0xff]
        %v659 = vld [vmem:[%s4 + $0x1d0] sm:$0xff]
        %v660 = vld [vmem:[%s4 + $0x1d8] sm:$0xff]
        %v661 = vld [vmem:[%s4 + $0x1e0] sm:$0xff]
        %v662 = vld [vmem:[%s4 + $0x1e8] sm:$0xff]
        %v663 = vld [vmem:[%s4 + $0x1f0] sm:$0xff]
        %v664 = vld [vmem:[%s4 + $0x1f8] sm:$0xff]
        %v665 = vld [vmem:[%s4 + $0x200] sm:$0xff]
        %v666 = vld [vmem:[%s4 + $0x208] sm:$0xff]
        %v667 = vld [vmem:[%s4 + $0x210] sm:$0xff]
        %v668 = vld [vmem:[%s4 + $0x218] sm:$0xff]
        %v669 = vld [vmem:[%s4 + $0x220] sm:$0xff]
        %v670 = vld [vmem:[%s4 + $0x228] sm:$0xff]
        %v671 = vld [vmem:[%s4 + $0x230] sm:$0xff]
        %v672 = vld [vmem:[%s4 + $0x238] sm:$0xff]
        %v673 = vld [vmem:[%s4 + $0x240] sm:$0xff]
        %v674 = vld [vmem:[%s4 + $0x248] sm:$0xff]
        %v675 = vld [vmem:[%s4 + $0x250] sm:$0xff]
        %v676 = vld [vmem:[%s4 + $0x258] sm:$0xff]
        %v677 = vld [vmem:[%s4 + $0x260] sm:$0xff]
        %v678 = vld [vmem:[%s4 + $0x268] sm:$0xff]
        %v679 = vld [vmem:[%s4 + $0x270] sm:$0xff]
        %v680 = vld [vmem:[%s4 + $0x278] sm:$0xff]
        %v687 = vunpack.c.l.b16 %v595
        %v688 = vunpack.c.h.b16 %v595
        %v689 = vunpack.c.l.b16 %v596
        %v690 = vunpack.c.h.b16 %v596
        %v691 = vunpack.c.l.b16 %v597
        %v692 = vunpack.c.l.b16 %v598
        %v693 = vunpack.c.h.b16 %v598
        %v694 = vunpack.c.l.b16 %v599
        %v695 = vunpack.c.h.b16 %v599
        %v696 = vunpack.c.l.b16 %v600
        %v697 = vpack.c.b16 %v692, %v687
        %v698 = vpack.c.b16 %v693, %v688
        %v699 = vpack.c.b16 %v694, %v689
        %v700 = vpack.c.b16 %v695, %v690
        %v701 = vpack.c.b16 %v696, %v691
        %v787 = vunpack.c.l.b16 %v601
        %v788 = vunpack.c.h.b16 %v601
        %v789 = vunpack.c.l.b16 %v602
        %v790 = vunpack.c.h.b16 %v602
        %v791 = vunpack.c.l.b16 %v603
        %v792 = vunpack.c.h.b16 %v603
        %v793 = vunpack.c.l.b16 %v604
        %v794 = vunpack.c.h.b16 %v604
        %v795 = vunpack.c.l.b16 %v605
        %v796 = vunpack.c.h.b16 %v605
        %v797 = vunpack.c.l.b16 %v606
        %v798 = vunpack.c.h.b16 %v606
        %v799 = vunpack.c.l.b16 %v607
        %v800 = vunpack.c.h.b16 %v607
        %v801 = vunpack.c.l.b16 %v608
        %v802 = vunpack.c.h.b16 %v608
        %v803 = vunpack.c.l.b16 %v609
        %v804 = vunpack.c.h.b16 %v609
        %v805 = vunpack.c.l.b16 %v610
        %v806 = vunpack.c.h.b16 %v610
        %v807 = vunpack.c.l.b16 %v611
        %v808 = vunpack.c.h.b16 %v611
        %v809 = vunpack.c.l.b16 %v612
        %v810 = vunpack.c.h.b16 %v612
        %v811 = vunpack.c.l.b16 %v613
        %v812 = vunpack.c.h.b16 %v613
        %v813 = vunpack.c.l.b16 %v614
        %v814 = vunpack.c.h.b16 %v614
        %v815 = vunpack.c.l.b16 %v615
        %v816 = vunpack.c.h.b16 %v615
        %v817 = vunpack.c.l.b16 %v616
        %v818 = vunpack.c.h.b16 %v616
        %v819 = vunpack.c.l.b16 %v617
        %v820 = vunpack.c.h.b16 %v617
        %v821 = vunpack.c.l.b16 %v618
        %v822 = vunpack.c.h.b16 %v618
        %v823 = vunpack.c.l.b16 %v619
        %v824 = vunpack.c.h.b16 %v619
        %v825 = vunpack.c.l.b16 %v620
        %v826 = vunpack.c.h.b16 %v620
        %v827 = vunpack.c.l.b16 %v621
        %v828 = vunpack.c.h.b16 %v621
        %v829 = vunpack.c.l.b16 %v622
        %v830 = vunpack.c.h.b16 %v622
        %v831 = vunpack.c.l.b16 %v623
        %v832 = vunpack.c.h.b16 %v623
        %v833 = vunpack.c.l.b16 %v624
        %v834 = vunpack.c.h.b16 %v624
        %v835 = vunpack.c.l.b16 %v625
        %v836 = vunpack.c.h.b16 %v625
        %v837 = vunpack.c.l.b16 %v626
        %v838 = vunpack.c.h.b16 %v626
        %v839 = vunpack.c.l.b16 %v627
        %v840 = vunpack.c.h.b16 %v627
        %v841 = vunpack.c.l.b16 %v628
        %v842 = vunpack.c.h.b16 %v628
        %v843 = vunpack.c.l.b16 %v629
        %v844 = vunpack.c.h.b16 %v629
        %v845 = vunpack.c.l.b16 %v630
        %v846 = vunpack.c.h.b16 %v630
        %v847 = vunpack.c.l.b16 %v631
        %v848 = vunpack.c.h.b16 %v631
        %v849 = vunpack.c.l.b16 %v632
        %v850 = vunpack.c.h.b16 %v632
        %v851 = vunpack.c.l.b16 %v633
        %v852 = vunpack.c.h.b16 %v633
        %v853 = vunpack.c.l.b16 %v634
        %v854 = vunpack.c.h.b16 %v634
        %v855 = vunpack.c.l.b16 %v635
        %v856 = vunpack.c.h.b16 %v635
        %v857 = vunpack.c.l.b16 %v636
        %v858 = vunpack.c.h.b16 %v636
        %v859 = vunpack.c.l.b16 %v637
        %v860 = vunpack.c.h.b16 %v637
        %v861 = vunpack.c.l.b16 %v638
        %v862 = vunpack.c.h.b16 %v638
        %v863 = vunpack.c.l.b16 %v639
        %v864 = vunpack.c.h.b16 %v639
        %v865 = vunpack.c.l.b16 %v640
        %v866 = vunpack.c.h.b16 %v640
        %v867 = vunpack.c.l.b16 %v641
        %v868 = vunpack.c.h.b16 %v641
        %v869 = vunpack.c.l.b16 %v642
        %v870 = vunpack.c.h.b16 %v642
        %v871 = vunpack.c.l.b16 %v643
        %v872 = vunpack.c.h.b16 %v643
        %v873 = vunpack.c.l.b16 %v644
        %v874 = vunpack.c.h.b16 %v644
        %v875 = vunpack.c.l.b16 %v645
        %v876 = vunpack.c.h.b16 %v645
        %v877 = vunpack.c.l.b16 %v646
        %v878 = vunpack.c.h.b16 %v646
        %v879 = vunpack.c.l.b16 %v647
        %v880 = vunpack.c.h.b16 %v647
        %v881 = vunpack.c.l.b16 %v648
        %v882 = vunpack.c.h.b16 %v648
        %v883 = vunpack.c.l.b16 %v649
        %v884 = vunpack.c.h.b16 %v649
        %v885 = vunpack.c.l.b16 %v650
        %v886 = vunpack.c.h.b16 %v650
        %v887 = vunpack.c.l.b16 %v651
        %v888 = vunpack.c.h.b16 %v651
        %v889 = vunpack.c.l.b16 %v652
        %v890 = vunpack.c.h.b16 %v652
        %v891 = vunpack.c.l.b16 %v653
        %v892 = vunpack.c.h.b16 %v653
        %v893 = vunpack.c.l.b16 %v654
        %v894 = vunpack.c.h.b16 %v654
        %v895 = vunpack.c.l.b16 %v655
        %v896 = vunpack.c.h.b16 %v655
        %v897 = vunpack.c.l.b16 %v656
        %v898 = vunpack.c.h.b16 %v656
        %v899 = vunpack.c.l.b16 %v657
        %v900 = vunpack.c.h.b16 %v657
        %v901 = vunpack.c.l.b16 %v658
        %v902 = vunpack.c.h.b16 %v658
        %v903 = vunpack.c.l.b16 %v659
        %v904 = vunpack.c.h.b16 %v659
        %v905 = vunpack.c.l.b16 %v660
        %v906 = vunpack.c.h.b16 %v660
        %v907 = vunpack.c.l.b16 %v661
        %v908 = vunpack.c.h.b16 %v661
        %v909 = vunpack.c.l.b16 %v662
        %v910 = vunpack.c.h.b16 %v662
        %v911 = vunpack.c.l.b16 %v663
        %v912 = vunpack.c.h.b16 %v663
        %v913 = vunpack.c.l.b16 %v664
        %v914 = vunpack.c.h.b16 %v664
        %v915 = vunpack.c.l.b16 %v665
        %v916 = vunpack.c.h.b16 %v665
        %v917 = vunpack.c.l.b16 %v666
        %v918 = vunpack.c.h.b16 %v666
        %v919 = vunpack.c.l.b16 %v667
        %v920 = vunpack.c.h.b16 %v667
        %v921 = vunpack.c.l.b16 %v668
        %v922 = vunpack.c.h.b16 %v668
        %v923 = vunpack.c.l.b16 %v669
        %v924 = vunpack.c.h.b16 %v669
        %v925 = vunpack.c.l.b16 %v670
        %v926 = vunpack.c.h.b16 %v670
        %v927 = vunpack.c.l.b16 %v671
        %v928 = vunpack.c.h.b16 %v671
        %v929 = vunpack.c.l.b16 %v672
        %v930 = vunpack.c.h.b16 %v672
        %v931 = vunpack.c.l.b16 %v673
        %v932 = vunpack.c.h.b16 %v673
        %v933 = vunpack.c.l.b16 %v674
        %v934 = vunpack.c.h.b16 %v674
        %v935 = vunpack.c.l.b16 %v675
        %v936 = vunpack.c.h.b16 %v675
        %v937 = vunpack.c.l.b16 %v676
        %v938 = vunpack.c.h.b16 %v676
        %v939 = vunpack.c.l.b16 %v677
        %v940 = vunpack.c.h.b16 %v677
        %v941 = vunpack.c.l.b16 %v678
        %v942 = vunpack.c.h.b16 %v678
        %v943 = vunpack.c.l.b16 %v679
        %v944 = vunpack.c.h.b16 %v679
        %v945 = vunpack.c.l.b16 %v680
        %v946 = vunpack.c.h.b16 %v680
        %v947 = vpack.c.b16 %v789, %v787
        %v948 = vpack.c.b16 %v790, %v788
        %v949 = vpack.c.b16 %v793, %v791
        %v950 = vpack.c.b16 %v794, %v792
        %v951 = vpack.c.b16 %v797, %v795
        %v952 = vpack.c.b16 %v798, %v796
        %v953 = vpack.c.b16 %v801, %v799
        %v954 = vpack.c.b16 %v802, %v800
        %v955 = vpack.c.b16 %v805, %v803
        %v956 = vpack.c.b16 %v806, %v804
        %v957 = vpack.c.b16 %v809, %v807
        %v958 = vpack.c.b16 %v810, %v808
        %v959 = vpack.c.b16 %v813, %v811
        %v960 = vpack.c.b16 %v814, %v812
        %v961 = vpack.c.b16 %v817, %v815
        %v962 = vpack.c.b16 %v818, %v816
        %v963 = vpack.c.b16 %v821, %v819
        %v964 = vpack.c.b16 %v822, %v820
        %v965 = vpack.c.b16 %v825, %v823
        %v966 = vpack.c.b16 %v826, %v824
        %v967 = vpack.c.b16 %v829, %v827
        %v968 = vpack.c.b16 %v830, %v828
        %v969 = vpack.c.b16 %v833, %v831
        %v970 = vpack.c.b16 %v834, %v832
        %v971 = vpack.c.b16 %v837, %v835
        %v972 = vpack.c.b16 %v838, %v836
        %v973 = vpack.c.b16 %v841, %v839
        %v974 = vpack.c.b16 %v842, %v840
        %v975 = vpack.c.b16 %v845, %v843
        %v976 = vpack.c.b16 %v846, %v844
        %v977 = vpack.c.b16 %v849, %v847
        %v978 = vpack.c.b16 %v850, %v848
        %v979 = vpack.c.b16 %v853, %v851
        %v980 = vpack.c.b16 %v854, %v852
        %v981 = vpack.c.b16 %v857, %v855
        %v982 = vpack.c.b16 %v858, %v856
        %v983 = vpack.c.b16 %v861, %v859
        %v984 = vpack.c.b16 %v862, %v860
        %v985 = vpack.c.b16 %v865, %v863
        %v986 = vpack.c.b16 %v866, %v864
        %v987 = vpack.c.b16 %v869, %v867
        %v988 = vpack.c.b16 %v870, %v868
        %v989 = vpack.c.b16 %v873, %v871
        %v990 = vpack.c.b16 %v874, %v872
        %v991 = vpack.c.b16 %v877, %v875
        %v992 = vpack.c.b16 %v878, %v876
        %v993 = vpack.c.b16 %v881, %v879
        %v994 = vpack.c.b16 %v882, %v880
        %v995 = vpack.c.b16 %v885, %v883
        %v996 = vpack.c.b16 %v886, %v884
        %v997 = vpack.c.b16 %v889, %v887
        %v998 = vpack.c.b16 %v890, %v888
        %v999 = vpack.c.b16 %v893, %v891
        %v1000 = vpack.c.b16 %v894, %v892
        %v1001 = vpack.c.b16 %v897, %v895
        %v1002 = vpack.c.b16 %v898, %v896
        %v1003 = vpack.c.b16 %v901, %v899
        %v1004 = vpack.c.b16 %v902, %v900
        %v1005 = vpack.c.b16 %v905, %v903
        %v1006 = vpack.c.b16 %v906, %v904
        %v1007 = vpack.c.b16 %v909, %v907
        %v1008 = vpack.c.b16 %v910, %v908
        %v1009 = vpack.c.b16 %v913, %v911
        %v1010 = vpack.c.b16 %v914, %v912
        %v1011 = vpack.c.b16 %v917, %v915
        %v1012 = vpack.c.b16 %v918, %v916
        %v1013 = vpack.c.b16 %v921, %v919
        %v1014 = vpack.c.b16 %v922, %v920
        %v1015 = vpack.c.b16 %v925, %v923
        %v1016 = vpack.c.b16 %v926, %v924
        %v1017 = vpack.c.b16 %v929, %v927
        %v1018 = vpack.c.b16 %v930, %v928
        %v1019 = vpack.c.b16 %v933, %v931
        %v1020 = vpack.c.b16 %v934, %v932
        %v1021 = vpack.c.b16 %v937, %v935
        %v1022 = vpack.c.b16 %v938, %v936
        %v1023 = vpack.c.b16 %v941, %v939
        %v1024 = vpack.c.b16 %v942, %v940
        %v1025 = vpack.c.b16 %v945, %v943
        %v1026 = vpack.c.b16 %v946, %v944
        %1107 = vmatprep.subr.bf16.mxu0 %v962
        %1108 = vmatpush1.bf16.msra.mxu0 %v961
        %1109 = vmatprep.subr.bf16.mxu0 %v960
        %1110 = vmatpush1.bf16.msra.mxu0 %v959
        %1111 = vmatprep.subr.bf16.mxu0 %v958
        %1112 = vmatpush1.bf16.msra.mxu0 %v957
        %1113 = vmatprep.subr.bf16.mxu0 %v956
        %1114 = vmatpush1.bf16.msra.mxu0 %v955
        %1115 = vmatprep.subr.bf16.mxu0 %v954
        %1116 = vmatpush1.bf16.msra.mxu0 %v953
        %1117 = vmatprep.subr.bf16.mxu0 %v952
        %1118 = vmatpush1.bf16.msra.mxu0 %v951
        %1119 = vmatprep.subr.bf16.mxu0 %v950
        %1120 = vmatpush1.bf16.msra.mxu0 %v949
        %1121 = vmatprep.subr.bf16.mxu0 %v948
        %1122 = vmatpush1.bf16.msra.mxu0 %v947
        %1123 = vmatprep.subr.bf16.mxu0 %v978
        %1124 = vmatpush2.bf16.msra.mxu0 %v977
        %1125 = vmatprep.subr.bf16.mxu0 %v976
        %1126 = vmatpush2.bf16.msra.mxu0 %v975
        %1127 = vmatprep.subr.bf16.mxu0 %v974
        %1128 = vmatpush2.bf16.msra.mxu0 %v973
        %1129 = vmatprep.subr.bf16.mxu0 %v972
        %1130 = vmatpush2.bf16.msra.mxu0 %v971
        %1131 = vmatprep.subr.bf16.mxu0 %v970
        %1132 = vmatpush2.bf16.msra.mxu0 %v969
        %1133 = vmatprep.subr.bf16.mxu0 %v968
        %1134 = vmatpush2.bf16.msra.mxu0 %v967
        %1135 = vmatprep.subr.bf16.mxu0 %v966
        %1136 = vmatpush2.bf16.msra.mxu0 %v965
        %1137 = vmatprep.subr.bf16.mxu0 %v964
        %1138 = vmatpush2.bf16.msra.mxu0 %v963
        %1139 = vmatprep.mubr.bf16.mxu0 %v698
        %1140 = vmatmul.mubr.bf16.gmra.mxu0 %v697
        %v1141 = vpop.f32.mrf.mxu0
        %v1142 = vadd.f32 0.0, %v1141
        %v1143 = vpop.f32.mrf.mxu0
        %v1144 = vadd.f32 0.0, %v1143
        %v1145 = vpop.f32.mrf.mxu0
        %v1146 = vadd.f32 0.0, %v1145
        %v1147 = vpop.f32.mrf.mxu0
        %v1148 = vadd.f32 0.0, %v1147
        %1149 = vdwg.mxu0
        %1150 = vmatprep.subr.bf16.mxu0 %v994
        %1151 = vmatpush1.bf16.msra.mxu0 %v993
        %1152 = vmatprep.subr.bf16.mxu0 %v992
        %1153 = vmatpush1.bf16.msra.mxu0 %v991
        %1154 = vmatprep.subr.bf16.mxu0 %v990
        %1155 = vmatpush1.bf16.msra.mxu0 %v989
        %1156 = vmatprep.subr.bf16.mxu0 %v988
        %1157 = vmatpush1.bf16.msra.mxu0 %v987
        %1158 = vmatprep.subr.bf16.mxu0 %v986
        %1159 = vmatpush1.bf16.msra.mxu0 %v985
        %1160 = vmatprep.subr.bf16.mxu0 %v984
        %1161 = vmatpush1.bf16.msra.mxu0 %v983
        %1162 = vmatprep.subr.bf16.mxu0 %v982
        %1163 = vmatpush1.bf16.msra.mxu0 %v981
        %1164 = vmatprep.subr.bf16.mxu0 %v980
        %1165 = vmatpush1.bf16.msra.mxu0 %v979
        %1166 = vmatprep.subr.bf16.mxu0 %v1010
        %1167 = vmatpush2.bf16.msra.mxu0 %v1009
        %1168 = vmatprep.subr.bf16.mxu0 %v1008
        %1169 = vmatpush2.bf16.msra.mxu0 %v1007
        %1170 = vmatprep.subr.bf16.mxu0 %v1006
        %1171 = vmatpush2.bf16.msra.mxu0 %v1005
        %1172 = vmatprep.subr.bf16.mxu0 %v1004
        %1173 = vmatpush2.bf16.msra.mxu0 %v1003
        %1174 = vmatprep.subr.bf16.mxu0 %v1002
        %1175 = vmatpush2.bf16.msra.mxu0 %v1001
        %1176 = vmatprep.subr.bf16.mxu0 %v1000
        %1177 = vmatpush2.bf16.msra.mxu0 %v999
        %1178 = vmatprep.subr.bf16.mxu0 %v998
        %1179 = vmatpush2.bf16.msra.mxu0 %v997
        %1180 = vmatprep.subr.bf16.mxu0 %v996
        %1181 = vmatpush2.bf16.msra.mxu0 %v995
        %1182 = vmatprep.mubr.bf16.mxu0 %v700
        %1183 = vmatmul.mubr.bf16.gmra.mxu0 %v699
        %v1184 = vpop.f32.mrf.mxu0
        %v1185 = vadd.f32 %v1142, %v1184
        %v1186 = vpop.f32.mrf.mxu0
        %v1187 = vadd.f32 %v1144, %v1186
        %v1188 = vpop.f32.mrf.mxu0
        %v1189 = vadd.f32 %v1146, %v1188
        %v1190 = vpop.f32.mrf.mxu0
        %v1191 = vadd.f32 %v1148, %v1190
        %1192 = vdwg.mxu0
        %1193 = vmatprep.subr.bf16.mxu0 %v1026
        %1194 = vmatpush1.bf16.msra.mxu0 %v1025
        %1195 = vmatprep.subr.bf16.mxu0 %v1024
        %1196 = vmatpush1.bf16.msra.mxu0 %v1023
        %1197 = vmatprep.subr.bf16.mxu0 %v1022
        %1198 = vmatpush1.bf16.msra.mxu0 %v1021
        %1199 = vmatprep.subr.bf16.mxu0 %v1020
        %1200 = vmatpush1.bf16.msra.mxu0 %v1019
        %1201 = vmatprep.subr.bf16.mxu0 %v1018
        %1202 = vmatpush1.bf16.msra.mxu0 %v1017
        %1203 = vmatprep.subr.bf16.mxu0 %v1016
        %1204 = vmatpush1.bf16.msra.mxu0 %v1015
        %1205 = vmatprep.subr.bf16.mxu0 %v1014
        %1206 = vmatpush1.bf16.msra.mxu0 %v1013
        %1207 = vmatprep.subr.bf16.mxu0 %v1012
        %1208 = vmatpush1.bf16.msra.mxu0 %v1011
        %1209 = vmatprep.subr.bf16.mxu0 0
        %1210 = vmatpush2.bf16.msra.mxu0 0
        %1211 = vmatprep.subr.bf16.mxu0 0
        %1212 = vmatpush2.bf16.msra.mxu0 0
        %1213 = vmatprep.subr.bf16.mxu0 0
        %1214 = vmatpush2.bf16.msra.mxu0 0
        %1215 = vmatprep.subr.bf16.mxu0 0
        %1216 = vmatpush2.bf16.msra.mxu0 0
        %1217 = vmatprep.subr.bf16.mxu0 0
        %1218 = vmatpush2.bf16.msra.mxu0 0
        %1219 = vmatprep.subr.bf16.mxu0 0
        %1220 = vmatpush2.bf16.msra.mxu0 0
        %1221 = vmatprep.subr.bf16.mxu0 0
        %1222 = vmatpush2.bf16.msra.mxu0 0
        %1223 = vmatprep.subr.bf16.mxu0 0
        %1224 = vmatpush2.bf16.msra.mxu0 0
        %1225 = vmatprep.mubr.bf16.mxu0 0
        %1226 = vmatmul.mubr.bf16.gmra.mxu0 %v701
        %v1227 = vpop.f32.mrf.mxu0
        %v1228 = vadd.f32 %v1185, %v1227
        %v1229 = vpop.f32.mrf.mxu0
        %v1230 = vadd.f32 %v1187, %v1229
        %v1231 = vpop.f32.mrf.mxu0
        %v1232 = vadd.f32 %v1189, %v1231
        %v1233 = vpop.f32.mrf.mxu0
        %v1234 = vadd.f32 %v1191, %v1233
        %1235 = vdwg.mxu0
        %v1236 = vld [vmem:[%s5] sm:$0x3]
        %v1238 = vlaneseq
        %v1239 = vshrl.u32 %v1238, 7
        %v1240 = vsub.s32 0, %v1239
        %v1241 = vrot.slane %v1236, %v1240
        %v1242 = vlaneseq
        %v1243 = vshrl.u32 %v1242, 7
        %v1244 = vsub.s32 1, %v1243
        %v1245 = vrot.slane %v1236, %v1244
        %v1248 = vmul.f32 %v1228, %v1241
        %v1249 = vmul.f32 %v1230, %v1245
        %v1250 = vmul.f32 %v1232, %v1241
        %v1251 = vmul.f32 %v1234, %v1245
        %v1252 = vld [vmem:[%s6] sm:$0x3]
        %v1254 = vlaneseq
        %v1255 = vshrl.u32 %v1254, 7
        %v1256 = vsub.s32 0, %v1255
        %v1257 = vrot.slane %v1252, %v1256
        %v1258 = vlaneseq
        %v1259 = vshrl.u32 %v1258, 7
        %v1260 = vsub.s32 1, %v1259
        %v1261 = vrot.slane %v1252, %v1260
        %v1264 = vadd.f32 %v1248, %v1257
        %v1265 = vadd.f32 %v1249, %v1261
        %v1266 = vadd.f32 %v1250, %v1257
        %v1267 = vadd.f32 %v1251, %v1261
        %v1268 = vmax.f32 %v1264, 0.0
        %v1269 = vmax.f32 %v1265, 0.0
        %v1270 = vmax.f32 %v1266, 0.0
        %v1271 = vmax.f32 %v1267, 0.0
        %v1272 = vpack.c.bf16 %v1270, %v1268
        %v1273 = vpack.c.bf16 %v1271, %v1269
        %vm1274 = vsmask.f32 4352
        %vm1275 = vmand %vm511, %vm1274
        %vm1276 = vmor %vm1275, %vm522
        %v1277 = vld [vmem:[#allocation3] sm:$0x11]
        %v1278 = vsel %vm1276, 0, %v1277
        %1279 = vst [vmem:[#allocation3] sm:$0x11] %v1278
        %v1282 = vunpack.c.l.b16 %v1272
        %v1283 = vunpack.c.l.b16 %v1273
        %v1284 = vunpack.c.h.b16 %v1272
        %v1285 = vunpack.c.h.b16 %v1273
        %v1286 = vpack.c.b16 %v1283, %v1282
        %v1287 = vpack.c.b16 %v1285, %v1284
        %v1289 = vshrl.u32 %v1286, 16
        %v1291 = vrot.slane %v1289, 7
        %v1292 = vshll.u32 %v1286, 16
        %v1294 = vor.u32 %v1291, %v1292
        %v1295 = vrot.slane %v1291, 4
        %v1297 = vshrl.u32 %v1287, 16
        %v1299 = vrot.slane %v1297, 7
        %v1300 = vshll.u32 %v1287, 16
        %v1302 = vor.u32 %v1299, %v1300
        %v1303 = vsel %vm527, %v1295, %v1302
        %vm1306 = vcmask 1047556
        %vm1307 = vsmask.f32 7954
        %vm1308 = vmand %vm1306, %vm1307
        %vm1309 = vmor %vm1308, %vm548
        %v1310 = vld [vmem:[#allocation3] sm:$0xff]
        %v1311 = vsel %vm1309, %v1294, %v1310
        %1312 = vst [vmem:[#allocation3] sm:$0xff] %v1311
        %1313 = vst [vmem:[#allocation3 + $0x18] sm:$0xff] %v1303
        %1316 = vst [vmem:[#allocation3 + $0x8] sm:$0xff] %v1286
        %1317 = vst [vmem:[#allocation3 + $0x20] sm:$0xff] %v1287
        %v1318 = vrot.slane %v1289, 4
        %v1319 = vrot.slane %v1292, 5
        %v1320 = vor.u32 %v1318, %v1319
        %v1321 = vrot.slane %v1320, 4
        %v1322 = vrot.slane %v1300, 5
        %v1323 = vsel %vm559, %v1321, %v1322
        %v1324 = vrot.slane %v1297, 4
        %v1325 = vor.u32 %v1324, %v1322
        %v1326 = vrot.slane %v1325, 4
        %1329 = vst [vmem:[#allocation3 + $0x10] sm:$0xff] %v1323
        %vm1330 = vsmask.f32 7424
        %vm1331 = vmand %vm1306, %vm1330
        %vm1332 = vmor %vm1331, %vm572
        %v1333 = vld [vmem:[#allocation3 + $0x28] sm:$0xff]
        %v1334 = vsel %vm1332, %v1326, %v1333
        %1335 = vst [vmem:[#allocation3 + $0x28] sm:$0xff] %v1334
        %vm1336 = vcmask 1047559
        %vm1337 = vsmask.f32 7966
        %vm1338 = vmand %vm1336, %vm1337
        %vm1339 = vmor %vm1338, %vm578
        %v1340 = vld [vmem:[#allocation3 + $0x28] sm:$0x88]
        %v1341 = vsel %vm1339, 0, %v1340
        %1342 = vst [vmem:[#allocation3 + $0x28] sm:$0x88] %v1341
        %v1343 = vld [vmem:[#allocation3] sm:$0xff]
        %v1344 = vld [vmem:[#allocation3 + $0x8] sm:$0xff]
        %v1345 = vld [vmem:[#allocation3 + $0x10] sm:$0xff]
        %v1346 = vld [vmem:[#allocation3 + $0x18] sm:$0xff]
        %v1347 = vld [vmem:[#allocation3 + $0x20] sm:$0xff]
        %v1348 = vld [vmem:[#allocation3 + $0x28] sm:$0xff]
        %v1349 = vld [vmem:[%s7] sm:$0xf]
        %v1350 = vld [vmem:[%s7 + $0x4] sm:$0xf]
        %v1351 = vld [vmem:[%s7 + $0x8] sm:$0xf]
        %v1352 = vld [vmem:[%s7 + $0xc] sm:$0xf]
        %v1353 = vld [vmem:[%s7 + $0x10] sm:$0xf]
        %v1354 = vld [vmem:[%s7 + $0x14] sm:$0xf]
        %v1355 = vld [vmem:[%s7 + $0x18] sm:$0xf]
        %v1356 = vld [vmem:[%s7 + $0x1c] sm:$0xf]
        %v1357 = vld [vmem:[%s7 + $0x20] sm:$0xf]
        %v1358 = vld [vmem:[%s7 + $0x24] sm:$0xf]
        %v1359 = vld [vmem:[%s7 + $0x28] sm:$0xf]
        %v1360 = vld [vmem:[%s7 + $0x2c] sm:$0xf]
        %v1361 = vld [vmem:[%s7 + $0x30] sm:$0xf]
        %v1362 = vld [vmem:[%s7 + $0x34] sm:$0xf]
        %v1363 = vld [vmem:[%s7 + $0x38] sm:$0xf]
        %v1364 = vld [vmem:[%s7 + $0x3c] sm:$0xf]
        %v1365 = vld [vmem:[%s7 + $0x40] sm:$0xf]
        %v1366 = vld [vmem:[%s7 + $0x44] sm:$0xf]
        %v1367 = vld [vmem:[%s7 + $0x48] sm:$0xf]
        %v1368 = vld [vmem:[%s7 + $0x4c] sm:$0xf]
        %v1369 = vld [vmem:[%s7 + $0x50] sm:$0xf]
        %v1370 = vld [vmem:[%s7 + $0x54] sm:$0xf]
        %v1371 = vld [vmem:[%s7 + $0x58] sm:$0xf]
        %v1372 = vld [vmem:[%s7 + $0x5c] sm:$0xf]
        %v1373 = vld [vmem:[%s7 + $0x60] sm:$0xf]
        %v1374 = vld [vmem:[%s7 + $0x64] sm:$0xf]
        %v1375 = vld [vmem:[%s7 + $0x68] sm:$0xf]
        %v1376 = vld [vmem:[%s7 + $0x6c] sm:$0xf]
        %v1377 = vld [vmem:[%s7 + $0x70] sm:$0xf]
        %v1378 = vld [vmem:[%s7 + $0x74] sm:$0xf]
        %v1379 = vld [vmem:[%s7 + $0x78] sm:$0xf]
        %v1380 = vld [vmem:[%s7 + $0x7c] sm:$0xf]
        %v1381 = vld [vmem:[%s7 + $0x80] sm:$0xf]
        %v1382 = vld [vmem:[%s7 + $0x84] sm:$0xf]
        %v1383 = vld [vmem:[%s7 + $0x88] sm:$0xf]
        %v1384 = vld [vmem:[%s7 + $0x8c] sm:$0xf]
        %v1385 = vld [vmem:[%s7 + $0x90] sm:$0xf]
        %v1386 = vld [vmem:[%s7 + $0x94] sm:$0xf]
        %v1387 = vld [vmem:[%s7 + $0x98] sm:$0xf]
        %v1388 = vld [vmem:[%s7 + $0x9c] sm:$0xf]
        %v1389 = vld [vmem:[%s7 + $0xa0] sm:$0xf]
        %v1390 = vld [vmem:[%s7 + $0xa4] sm:$0xf]
        %v1391 = vld [vmem:[%s7 + $0xa8] sm:$0xf]
        %v1392 = vld [vmem:[%s7 + $0xac] sm:$0xf]
        %v1393 = vld [vmem:[%s7 + $0xb0] sm:$0xf]
        %v1394 = vld [vmem:[%s7 + $0xb4] sm:$0xf]
        %v1395 = vld [vmem:[%s7 + $0xb8] sm:$0xf]
        %v1396 = vld [vmem:[%s7 + $0xbc] sm:$0xf]
        %v1397 = vld [vmem:[%s7 + $0xc0] sm:$0xf]
        %v1398 = vld [vmem:[%s7 + $0xc4] sm:$0xf]
        %v1399 = vld [vmem:[%s7 + $0xc8] sm:$0xf]
        %v1400 = vld [vmem:[%s7 + $0xcc] sm:$0xf]
        %v1401 = vld [vmem:[%s7 + $0xd0] sm:$0xf]
        %v1402 = vld [vmem:[%s7 + $0xd4] sm:$0xf]
        %v1403 = vld [vmem:[%s7 + $0xd8] sm:$0xf]
        %v1404 = vld [vmem:[%s7 + $0xdc] sm:$0xf]
        %v1405 = vld [vmem:[%s7 + $0xe0] sm:$0xf]
        %v1406 = vld [vmem:[%s7 + $0xe4] sm:$0xf]
        %v1407 = vld [vmem:[%s7 + $0xe8] sm:$0xf]
        %v1408 = vld [vmem:[%s7 + $0xec] sm:$0xf]
        %v1409 = vld [vmem:[%s7 + $0xf0] sm:$0xf]
        %v1410 = vld [vmem:[%s7 + $0xf4] sm:$0xf]
        %v1411 = vld [vmem:[%s7 + $0xf8] sm:$0xf]
        %v1412 = vld [vmem:[%s7 + $0xfc] sm:$0xf]
        %v1413 = vld [vmem:[%s7 + $0x100] sm:$0xf]
        %v1414 = vld [vmem:[%s7 + $0x104] sm:$0xf]
        %v1415 = vld [vmem:[%s7 + $0x108] sm:$0xf]
        %v1416 = vld [vmem:[%s7 + $0x10c] sm:$0xf]
        %v1417 = vld [vmem:[%s7 + $0x110] sm:$0xf]
        %v1418 = vld [vmem:[%s7 + $0x114] sm:$0xf]
        %v1419 = vld [vmem:[%s7 + $0x118] sm:$0xf]
        %v1420 = vld [vmem:[%s7 + $0x11c] sm:$0xf]
        %v1421 = vld [vmem:[%s7 + $0x120] sm:$0xf]
        %v1422 = vld [vmem:[%s7 + $0x124] sm:$0xf]
        %v1423 = vld [vmem:[%s7 + $0x128] sm:$0xf]
        %v1424 = vld [vmem:[%s7 + $0x12c] sm:$0xf]
        %v1425 = vld [vmem:[%s7 + $0x130] sm:$0xf]
        %v1426 = vld [vmem:[%s7 + $0x134] sm:$0xf]
        %v1427 = vld [vmem:[%s7 + $0x138] sm:$0xf]
        %v1428 = vld [vmem:[%s7 + $0x13c] sm:$0xf]
        %v1429 = vld [vmem:[%s7 + $0x140] sm:$0xf]
        %v1430 = vld [vmem:[%s7 + $0x144] sm:$0xf]
        %v1431 = vld [vmem:[%s7 + $0x148] sm:$0xf]
        %v1432 = vld [vmem:[%s7 + $0x14c] sm:$0xf]
        %v1433 = vld [vmem:[%s7 + $0x150] sm:$0xf]
        %v1434 = vld [vmem:[%s7 + $0x154] sm:$0xf]
        %v1435 = vld [vmem:[%s7 + $0x158] sm:$0xf]
        %v1436 = vld [vmem:[%s7 + $0x15c] sm:$0xf]
        %v1437 = vld [vmem:[%s7 + $0x160] sm:$0xf]
        %v1438 = vld [vmem:[%s7 + $0x164] sm:$0xf]
        %v1439 = vld [vmem:[%s7 + $0x168] sm:$0xf]
        %v1440 = vld [vmem:[%s7 + $0x16c] sm:$0xf]
        %v1441 = vld [vmem:[%s7 + $0x170] sm:$0xf]
        %v1442 = vld [vmem:[%s7 + $0x174] sm:$0xf]
        %v1443 = vld [vmem:[%s7 + $0x178] sm:$0xf]
        %v1444 = vld [vmem:[%s7 + $0x17c] sm:$0xf]
        %v1451 = vunpack.c.l.b16 %v1343
        %v1452 = vunpack.c.h.b16 %v1343
        %v1453 = vunpack.c.l.b16 %v1344
        %v1454 = vunpack.c.h.b16 %v1344
        %v1455 = vunpack.c.l.b16 %v1345
        %v1456 = vunpack.c.h.b16 %v1345
        %v1457 = vunpack.c.l.b16 %v1346
        %v1458 = vunpack.c.h.b16 %v1346
        %v1459 = vunpack.c.l.b16 %v1347
        %v1460 = vunpack.c.h.b16 %v1347
        %v1461 = vunpack.c.l.b16 %v1348
        %v1462 = vunpack.c.h.b16 %v1348
        %v1463 = vpack.c.b16 %v1457, %v1451
        %v1464 = vpack.c.b16 %v1458, %v1452
        %v1465 = vpack.c.b16 %v1459, %v1453
        %v1466 = vpack.c.b16 %v1460, %v1454
        %v1467 = vpack.c.b16 %v1461, %v1455
        %v1468 = vpack.c.b16 %v1462, %v1456
        %v1571 = vunpack.c.l.b16 %v1349
        %v1572 = vunpack.c.l.b16 %v1350
        %v1573 = vunpack.c.l.b16 %v1351
        %v1574 = vunpack.c.l.b16 %v1352
        %v1575 = vunpack.c.l.b16 %v1353
        %v1576 = vunpack.c.l.b16 %v1354
        %v1577 = vunpack.c.l.b16 %v1355
        %v1578 = vunpack.c.l.b16 %v1356
        %v1579 = vunpack.c.l.b16 %v1357
        %v1580 = vunpack.c.l.b16 %v1358
        %v1581 = vunpack.c.l.b16 %v1359
        %v1582 = vunpack.c.l.b16 %v1360
        %v1583 = vunpack.c.l.b16 %v1361
        %v1584 = vunpack.c.l.b16 %v1362
        %v1585 = vunpack.c.l.b16 %v1363
        %v1586 = vunpack.c.l.b16 %v1364
        %v1587 = vunpack.c.l.b16 %v1365
        %v1588 = vunpack.c.l.b16 %v1366
        %v1589 = vunpack.c.l.b16 %v1367
        %v1590 = vunpack.c.l.b16 %v1368
        %v1591 = vunpack.c.l.b16 %v1369
        %v1592 = vunpack.c.l.b16 %v1370
        %v1593 = vunpack.c.l.b16 %v1371
        %v1594 = vunpack.c.l.b16 %v1372
        %v1595 = vunpack.c.l.b16 %v1373
        %v1596 = vunpack.c.l.b16 %v1374
        %v1597 = vunpack.c.l.b16 %v1375
        %v1598 = vunpack.c.l.b16 %v1376
        %v1599 = vunpack.c.l.b16 %v1377
        %v1600 = vunpack.c.l.b16 %v1378
        %v1601 = vunpack.c.l.b16 %v1379
        %v1602 = vunpack.c.l.b16 %v1380
        %v1603 = vunpack.c.l.b16 %v1381
        %v1604 = vunpack.c.l.b16 %v1382
        %v1605 = vunpack.c.l.b16 %v1383
        %v1606 = vunpack.c.l.b16 %v1384
        %v1607 = vunpack.c.l.b16 %v1385
        %v1608 = vunpack.c.l.b16 %v1386
        %v1609 = vunpack.c.l.b16 %v1387
        %v1610 = vunpack.c.l.b16 %v1388
        %v1611 = vunpack.c.l.b16 %v1389
        %v1612 = vunpack.c.l.b16 %v1390
        %v1613 = vunpack.c.l.b16 %v1391
        %v1614 = vunpack.c.l.b16 %v1392
        %v1615 = vunpack.c.l.b16 %v1393
        %v1616 = vunpack.c.l.b16 %v1394
        %v1617 = vunpack.c.l.b16 %v1395
        %v1618 = vunpack.c.l.b16 %v1396
        %v1619 = vunpack.c.l.b16 %v1397
        %v1620 = vunpack.c.l.b16 %v1398
        %v1621 = vunpack.c.l.b16 %v1399
        %v1622 = vunpack.c.l.b16 %v1400
        %v1623 = vunpack.c.l.b16 %v1401
        %v1624 = vunpack.c.l.b16 %v1402
        %v1625 = vunpack.c.l.b16 %v1403
        %v1626 = vunpack.c.l.b16 %v1404
        %v1627 = vunpack.c.l.b16 %v1405
        %v1628 = vunpack.c.l.b16 %v1406
        %v1629 = vunpack.c.l.b16 %v1407
        %v1630 = vunpack.c.l.b16 %v1408
        %v1631 = vunpack.c.l.b16 %v1409
        %v1632 = vunpack.c.l.b16 %v1410
        %v1633 = vunpack.c.l.b16 %v1411
        %v1634 = vunpack.c.l.b16 %v1412
        %v1635 = vunpack.c.l.b16 %v1413
        %v1636 = vunpack.c.l.b16 %v1414
        %v1637 = vunpack.c.l.b16 %v1415
        %v1638 = vunpack.c.l.b16 %v1416
        %v1639 = vunpack.c.l.b16 %v1417
        %v1640 = vunpack.c.l.b16 %v1418
        %v1641 = vunpack.c.l.b16 %v1419
        %v1642 = vunpack.c.l.b16 %v1420
        %v1643 = vunpack.c.l.b16 %v1421
        %v1644 = vunpack.c.l.b16 %v1422
        %v1645 = vunpack.c.l.b16 %v1423
        %v1646 = vunpack.c.l.b16 %v1424
        %v1647 = vunpack.c.l.b16 %v1425
        %v1648 = vunpack.c.l.b16 %v1426
        %v1649 = vunpack.c.l.b16 %v1427
        %v1650 = vunpack.c.l.b16 %v1428
        %v1651 = vunpack.c.l.b16 %v1429
        %v1652 = vunpack.c.l.b16 %v1430
        %v1653 = vunpack.c.l.b16 %v1431
        %v1654 = vunpack.c.l.b16 %v1432
        %v1655 = vunpack.c.l.b16 %v1433
        %v1656 = vunpack.c.l.b16 %v1434
        %v1657 = vunpack.c.l.b16 %v1435
        %v1658 = vunpack.c.l.b16 %v1436
        %v1659 = vunpack.c.l.b16 %v1437
        %v1660 = vunpack.c.l.b16 %v1438
        %v1661 = vunpack.c.l.b16 %v1439
        %v1662 = vunpack.c.l.b16 %v1440
        %v1663 = vunpack.c.l.b16 %v1441
        %v1664 = vunpack.c.l.b16 %v1442
        %v1665 = vunpack.c.l.b16 %v1443
        %v1666 = vunpack.c.l.b16 %v1444
        %v1667 = vpack.c.b16 %v1572, %v1571
        %v1668 = vpack.c.b16 %v1574, %v1573
        %v1669 = vpack.c.b16 %v1576, %v1575
        %v1670 = vpack.c.b16 %v1578, %v1577
        %v1671 = vpack.c.b16 %v1580, %v1579
        %v1672 = vpack.c.b16 %v1582, %v1581
        %v1673 = vpack.c.b16 %v1584, %v1583
        %v1674 = vpack.c.b16 %v1586, %v1585
        %v1675 = vpack.c.b16 %v1588, %v1587
        %v1676 = vpack.c.b16 %v1590, %v1589
        %v1677 = vpack.c.b16 %v1592, %v1591
        %v1678 = vpack.c.b16 %v1594, %v1593
        %v1679 = vpack.c.b16 %v1596, %v1595
        %v1680 = vpack.c.b16 %v1598, %v1597
        %v1681 = vpack.c.b16 %v1600, %v1599
        %v1682 = vpack.c.b16 %v1602, %v1601
        %v1683 = vpack.c.b16 %v1604, %v1603
        %v1684 = vpack.c.b16 %v1606, %v1605
        %v1685 = vpack.c.b16 %v1608, %v1607
        %v1686 = vpack.c.b16 %v1610, %v1609
        %v1687 = vpack.c.b16 %v1612, %v1611
        %v1688 = vpack.c.b16 %v1614, %v1613
        %v1689 = vpack.c.b16 %v1616, %v1615
        %v1690 = vpack.c.b16 %v1618, %v1617
        %v1691 = vpack.c.b16 %v1620, %v1619
        %v1692 = vpack.c.b16 %v1622, %v1621
        %v1693 = vpack.c.b16 %v1624, %v1623
        %v1694 = vpack.c.b16 %v1626, %v1625
        %v1695 = vpack.c.b16 %v1628, %v1627
        %v1696 = vpack.c.b16 %v1630, %v1629
        %v1697 = vpack.c.b16 %v1632, %v1631
        %v1698 = vpack.c.b16 %v1634, %v1633
        %v1699 = vpack.c.b16 %v1636, %v1635
        %v1700 = vpack.c.b16 %v1638, %v1637
        %v1701 = vpack.c.b16 %v1640, %v1639
        %v1702 = vpack.c.b16 %v1642, %v1641
        %v1703 = vpack.c.b16 %v1644, %v1643
        %v1704 = vpack.c.b16 %v1646, %v1645
        %v1705 = vpack.c.b16 %v1648, %v1647
        %v1706 = vpack.c.b16 %v1650, %v1649
        %v1707 = vpack.c.b16 %v1652, %v1651
        %v1708 = vpack.c.b16 %v1654, %v1653
        %v1709 = vpack.c.b16 %v1656, %v1655
        %v1710 = vpack.c.b16 %v1658, %v1657
        %v1711 = vpack.c.b16 %v1660, %v1659
        %v1712 = vpack.c.b16 %v1662, %v1661
        %v1713 = vpack.c.b16 %v1664, %v1663
        %v1714 = vpack.c.b16 %v1666, %v1665
        %1763 = vmatprep.subr.bf16.mxu0 0
        %1764 = vmatpush1.bf16.msra.mxu0 %v1674
        %1765 = vmatprep.subr.bf16.mxu0 0
        %1766 = vmatpush1.bf16.msra.mxu0 %v1673
        %1767 = vmatprep.subr.bf16.mxu0 0
        %1768 = vmatpush1.bf16.msra.mxu0 %v1672
        %1769 = vmatprep.subr.bf16.mxu0 0
        %1770 = vmatpush1.bf16.msra.mxu0 %v1671
        %1771 = vmatprep.subr.bf16.mxu0 0
        %1772 = vmatpush1.bf16.msra.mxu0 %v1670
        %1773 = vmatprep.subr.bf16.mxu0 0
        %1774 = vmatpush1.bf16.msra.mxu0 %v1669
        %1775 = vmatprep.subr.bf16.mxu0 0
        %1776 = vmatpush1.bf16.msra.mxu0 %v1668
        %1777 = vmatprep.subr.bf16.mxu0 0
        %1778 = vmatpush1.bf16.msra.mxu0 %v1667
        %1779 = vmatprep.subr.bf16.mxu0 0
        %1780 = vmatpush2.bf16.msra.mxu0 %v1682
        %1781 = vmatprep.subr.bf16.mxu0 0
        %1782 = vmatpush2.bf16.msra.mxu0 %v1681
        %1783 = vmatprep.subr.bf16.mxu0 0
        %1784 = vmatpush2.bf16.msra.mxu0 %v1680
        %1785 = vmatprep.subr.bf16.mxu0 0
        %1786 = vmatpush2.bf16.msra.mxu0 %v1679
        %1787 = vmatprep.subr.bf16.mxu0 0
        %1788 = vmatpush2.bf16.msra.mxu0 %v1678
        %1789 = vmatprep.subr.bf16.mxu0 0
        %1790 = vmatpush2.bf16.msra.mxu0 %v1677
        %1791 = vmatprep.subr.bf16.mxu0 0
        %1792 = vmatpush2.bf16.msra.mxu0 %v1676
        %1793 = vmatprep.subr.bf16.mxu0 0
        %1794 = vmatpush2.bf16.msra.mxu0 %v1675
        %1795 = vmatprep.mubr.bf16.mxu0 %v1464
        %1796 = vmatmul.mubr.bf16.gmra.mxu0 %v1463
        %v1797 = vpop.f32.mrf.mxu0
        %v1798 = vadd.f32 0.0, %v1797
        %v1799 = vpop.f32.mrf.mxu0
        %v1800 = vpop.f32.mrf.mxu0
        %v1801 = vadd.f32 0.0, %v1800
        %v1802 = vpop.f32.mrf.mxu0
        %1803 = vdwg.mxu0
        %1804 = vmatprep.subr.bf16.mxu0 0
        %1805 = vmatpush1.bf16.msra.mxu0 %v1690
        %1806 = vmatprep.subr.bf16.mxu0 0
        %1807 = vmatpush1.bf16.msra.mxu0 %v1689
        %1808 = vmatprep.subr.bf16.mxu0 0
        %1809 = vmatpush1.bf16.msra.mxu0 %v1688
        %1810 = vmatprep.subr.bf16.mxu0 0
        %1811 = vmatpush1.bf16.msra.mxu0 %v1687
        %1812 = vmatprep.subr.bf16.mxu0 0
        %1813 = vmatpush1.bf16.msra.mxu0 %v1686
        %1814 = vmatprep.subr.bf16.mxu0 0
        %1815 = vmatpush1.bf16.msra.mxu0 %v1685
        %1816 = vmatprep.subr.bf16.mxu0 0
        %1817 = vmatpush1.bf16.msra.mxu0 %v1684
        %1818 = vmatprep.subr.bf16.mxu0 0
        %1819 = vmatpush1.bf16.msra.mxu0 %v1683
        %1820 = vmatprep.subr.bf16.mxu0 0
        %1821 = vmatpush2.bf16.msra.mxu0 %v1698
        %1822 = vmatprep.subr.bf16.mxu0 0
        %1823 = vmatpush2.bf16.msra.mxu0 %v1697
        %1824 = vmatprep.subr.bf16.mxu0 0
        %1825 = vmatpush2.bf16.msra.mxu0 %v1696
        %1826 = vmatprep.subr.bf16.mxu0 0
        %1827 = vmatpush2.bf16.msra.mxu0 %v1695
        %1828 = vmatprep.subr.bf16.mxu0 0
        %1829 = vmatpush2.bf16.msra.mxu0 %v1694
        %1830 = vmatprep.subr.bf16.mxu0 0
        %1831 = vmatpush2.bf16.msra.mxu0 %v1693
        %1832 = vmatprep.subr.bf16.mxu0 0
        %1833 = vmatpush2.bf16.msra.mxu0 %v1692
        %1834 = vmatprep.subr.bf16.mxu0 0
        %1835 = vmatpush2.bf16.msra.mxu0 %v1691
        %1836 = vmatprep.mubr.bf16.mxu0 %v1466
        %1837 = vmatmul.mubr.bf16.gmra.mxu0 %v1465
        %v1838 = vpop.f32.mrf.mxu0
        %v1839 = vadd.f32 %v1798, %v1838
        %v1840 = vpop.f32.mrf.mxu0
        %v1841 = vpop.f32.mrf.mxu0
        %v1842 = vadd.f32 %v1801, %v1841
        %v1843 = vpop.f32.mrf.mxu0
        %1844 = vdwg.mxu0
        %1845 = vmatprep.subr.bf16.mxu0 0
        %1846 = vmatpush1.bf16.msra.mxu0 %v1706
        %1847 = vmatprep.subr.bf16.mxu0 0
        %1848 = vmatpush1.bf16.msra.mxu0 %v1705
        %1849 = vmatprep.subr.bf16.mxu0 0
        %1850 = vmatpush1.bf16.msra.mxu0 %v1704
        %1851 = vmatprep.subr.bf16.mxu0 0
        %1852 = vmatpush1.bf16.msra.mxu0 %v1703
        %1853 = vmatprep.subr.bf16.mxu0 0
        %1854 = vmatpush1.bf16.msra.mxu0 %v1702
        %1855 = vmatprep.subr.bf16.mxu0 0
        %1856 = vmatpush1.bf16.msra.mxu0 %v1701
        %1857 = vmatprep.subr.bf16.mxu0 0
        %1858 = vmatpush1.bf16.msra.mxu0 %v1700
        %1859 = vmatprep.subr.bf16.mxu0 0
        %1860 = vmatpush1.bf16.msra.mxu0 %v1699
        %1861 = vmatprep.subr.bf16.mxu0 0
        %1862 = vmatpush2.bf16.msra.mxu0 %v1714
        %1863 = vmatprep.subr.bf16.mxu0 0
        %1864 = vmatpush2.bf16.msra.mxu0 %v1713
        %1865 = vmatprep.subr.bf16.mxu0 0
        %1866 = vmatpush2.bf16.msra.mxu0 %v1712
        %1867 = vmatprep.subr.bf16.mxu0 0
        %1868 = vmatpush2.bf16.msra.mxu0 %v1711
        %1869 = vmatprep.subr.bf16.mxu0 0
        %1870 = vmatpush2.bf16.msra.mxu0 %v1710
        %1871 = vmatprep.subr.bf16.mxu0 0
        %1872 = vmatpush2.bf16.msra.mxu0 %v1709
        %1873 = vmatprep.subr.bf16.mxu0 0
        %1874 = vmatpush2.bf16.msra.mxu0 %v1708
        %1875 = vmatprep.subr.bf16.mxu0 0
        %1876 = vmatpush2.bf16.msra.mxu0 %v1707
        %1877 = vmatprep.mubr.bf16.mxu0 %v1468
        %1878 = vmatmul.mubr.bf16.gmra.mxu0 %v1467
        %v1879 = vpop.f32.mrf.mxu0
        %v1880 = vadd.f32 %v1839, %v1879
        %v1881 = vpop.f32.mrf.mxu0
        %v1882 = vpop.f32.mrf.mxu0
        %v1883 = vadd.f32 %v1842, %v1882
        %v1884 = vpop.f32.mrf.mxu0
        %1885 = vdwg.mxu0
        %v1886 = vld [vmem:[%s8] sm:$0x1]
        %v1888 = vlaneseq
        %v1889 = vshrl.u32 %v1888, 7
        %v1890 = vsub.s32 0, %v1889
        %v1891 = vrot.slane %v1886, %v1890
        %v1893 = vmul.f32 %v1880, %v1891
        %v1894 = vmul.f32 %v1883, %v1891
        %v1895 = vld [vmem:[%s9] sm:$0x1]
        %v1897 = vlaneseq
        %v1898 = vshrl.u32 %v1897, 7
        %v1899 = vsub.s32 0, %v1898
        %v1900 = vrot.slane %v1895, %v1899
        %v1902 = vadd.f32 %v1893, %v1900
        %v1903 = vadd.f32 %v1894, %v1900
        %v1904 = vmax.f32 %v1902, 0.0
        %v1905 = vmax.f32 %v1903, 0.0
        %v1906 = vadd.f32 %v1904, %v1905
        %v1907 = vrot.slane %v1906, 4
        %v1908 = vadd.f32 %v1906, %v1907
        %v1909 = vrot.slane %v1908, 2
        %v1910 = vadd.f32 %v1908, %v1909
        %v1911 = vrot.slane %v1910, 1
        %v1912 = vadd.f32 %v1910, %v1911
        %v1913 = vrcp.pop 16.0
        %v1914 = vmul.f32 %v1912, %v1913
        %v1915 = vpack.c.bf16 %v1914, %v1914
        %v1916 = vld [vmem:[%s10] sm:$0xf]
        %v1917 = vld [vmem:[%s10 + $0x4] sm:$0xf]
        %v1918 = vld [vmem:[%s10 + $0x8] sm:$0xf]
        %v1919 = vld [vmem:[%s10 + $0xc] sm:$0xf]
        %v1920 = vld [vmem:[%s10 + $0x10] sm:$0xf]
        %v1921 = vld [vmem:[%s10 + $0x14] sm:$0xf]
        %v1922 = vld [vmem:[%s10 + $0x18] sm:$0xf]
        %v1923 = vld [vmem:[%s10 + $0x1c] sm:$0xf]
        %v1924 = vld [vmem:[%s10 + $0x20] sm:$0xf]
        %v1925 = vld [vmem:[%s10 + $0x24] sm:$0xf]
        %v1926 = vld [vmem:[%s10 + $0x28] sm:$0xf]
        %v1927 = vld [vmem:[%s10 + $0x2c] sm:$0xf]
        %v1928 = vld [vmem:[%s10 + $0x30] sm:$0xf]
        %v1929 = vld [vmem:[%s10 + $0x34] sm:$0xf]
        %v1930 = vld [vmem:[%s10 + $0x38] sm:$0xf]
        %v1931 = vld [vmem:[%s10 + $0x3c] sm:$0xf]
        %v1932 = vld [vmem:[%s11] sm:$0x1]
        %v1949 = vunpack.c.l.b16 %v1916
        %v1950 = vunpack.c.l.b16 %v1917
        %v1951 = vunpack.c.l.b16 %v1918
        %v1952 = vunpack.c.l.b16 %v1919
        %v1953 = vunpack.c.l.b16 %v1920
        %v1954 = vunpack.c.l.b16 %v1921
        %v1955 = vunpack.c.l.b16 %v1922
        %v1956 = vunpack.c.l.b16 %v1923
        %v1957 = vunpack.c.l.b16 %v1924
        %v1958 = vunpack.c.l.b16 %v1925
        %v1959 = vunpack.c.l.b16 %v1926
        %v1960 = vunpack.c.l.b16 %v1927
        %v1961 = vunpack.c.l.b16 %v1928
        %v1962 = vunpack.c.l.b16 %v1929
        %v1963 = vunpack.c.l.b16 %v1930
        %v1964 = vunpack.c.l.b16 %v1931
        %v1965 = vpack.c.b16 %v1950, %v1949
        %v1966 = vpack.c.b16 %v1952, %v1951
        %v1967 = vpack.c.b16 %v1954, %v1953
        %v1968 = vpack.c.b16 %v1956, %v1955
        %v1969 = vpack.c.b16 %v1958, %v1957
        %v1970 = vpack.c.b16 %v1960, %v1959
        %v1971 = vpack.c.b16 %v1962, %v1961
        %v1972 = vpack.c.b16 %v1964, %v1963
        %1981 = vmatprep.subr.bf16.mxu0 0
        %1982 = vmatpush1.bf16.msra.mxu0 %v1972
        %1983 = vmatprep.subr.bf16.mxu0 0
        %1984 = vmatpush1.bf16.msra.mxu0 %v1971
        %1985 = vmatprep.subr.bf16.mxu0 0
        %1986 = vmatpush1.bf16.msra.mxu0 %v1970
        %1987 = vmatprep.subr.bf16.mxu0 0
        %1988 = vmatpush1.bf16.msra.mxu0 %v1969
        %1989 = vmatprep.subr.bf16.mxu0 0
        %1990 = vmatpush1.bf16.msra.mxu0 %v1968
        %1991 = vmatprep.subr.bf16.mxu0 0
        %1992 = vmatpush1.bf16.msra.mxu0 %v1967
        %1993 = vmatprep.subr.bf16.mxu0 0
        %1994 = vmatpush1.bf16.msra.mxu0 %v1966
        %1995 = vmatprep.subr.bf16.mxu0 0
        %1996 = vmatpush1.bf16.msra.mxu0 %v1965
        %1997 = vmatprep.subr.bf16.mxu0 0
        %1998 = vmatpush2.bf16.msra.mxu0 0
        %1999 = vmatprep.subr.bf16.mxu0 0
        %2000 = vmatpush2.bf16.msra.mxu0 0
        %2001 = vmatprep.subr.bf16.mxu0 0
        %2002 = vmatpush2.bf16.msra.mxu0 0
        %2003 = vmatprep.subr.bf16.mxu0 0
        %2004 = vmatpush2.bf16.msra.mxu0 0
        %2005 = vmatprep.subr.bf16.mxu0 0
        %2006 = vmatpush2.bf16.msra.mxu0 0
        %2007 = vmatprep.subr.bf16.mxu0 0
        %2008 = vmatpush2.bf16.msra.mxu0 0
        %2009 = vmatprep.subr.bf16.mxu0 0
        %2010 = vmatpush2.bf16.msra.mxu0 0
        %2011 = vmatprep.subr.bf16.mxu0 0
        %2012 = vmatpush2.bf16.msra.mxu0 0
        %2013 = vmatprep.mubr.bf16.mxu0 0
        %2014 = vmatmul.mubr.bf16.gmra.mxu0 %v1915
        %v2015 = vpop.f32.mrf.mxu0
        %v2016 = vadd.f32 %v1932, %v2015
        %v2017 = vpop.f32.mrf.mxu0
        %v2018 = vpop.f32.mrf.mxu0
        %v2019 = vpop.f32.mrf.mxu0
        %2020 = vdwg.mxu0
        %vm2021 = vcmask 32768
        %2022 = vst.msk [vmem:[%s405] sm:$0x1] %vm2021, %v2016
        %s2023 = sand.u32 %s291, 1
        %s2024 = scalar_lea.sflag [#allocation5], %s2023
        %s2025 = sand.u32 %s291, 1
        %s2026 = scalar_lea.vmem [#allocation4], %s2025
        // Predicated region
        $region69: #{fcn_multitask_forward.1} parent=67 // pred_check
          %p2027 = pneg %p301
        $region70: #{fcn_multitask_forward.1} parent=67 // pred_check_branch
          %2029 = sbr.rel (%p2027) target = $region72
        $region71: #{fcn_multitask_forward.1} parent=67 // pred_region
          %s2031 = ssub.s32 16, 16
          %2032 = vsyncadd %s2024, %s2031
          %s2033 = smul.addr %s26, 16
          %s2034 = scalar_lea.hbm %s12, %s2033
          %s2036 = sshll.u32 %s2026, 4
          %s2037 = int_to_ptr.vmem [resolvable:$true] %s2036
          %2039 = dma.vmem_to_hbm [thread:$0]  %s2037, 16, %s2034, %s2024
        $region72: #{fcn_multitask_forward.1} parent=67 // pred_fallthru
          _
      $region68: #{fcn_multitask_forward.1} parent=5 // pred_fallthru
        _
      %p2040 = scmp.le.s32.totalorder 2, %s21
      // Predicated region
      $region73: #{fcn_multitask_forward.1} parent=5 // pred_check
        %p2041 = pneg %p2040
      $region74: #{fcn_multitask_forward.1} parent=5 // pred_check_branch
        %2043 = sbr.rel (%p2041) target = $region76
      $region75: #{fcn_multitask_forward.1} parent=5 // pred_region
        %s2044 = ssub.s32 %s21, 2
        // Predicated region
        $region77: #{fcn_multitask_forward.1} parent=75 // pred_check
          %p2045 = pneg %p307
        $region78: #{fcn_multitask_forward.1} parent=75 // pred_check_branch
          %2047 = sbr.rel (%p2045) target = $region80
        $region79: #{fcn_multitask_forward.1} parent=75 // pred_region
          %s2048 = sand.u32 %s292, 1
          %s2049 = scalar_lea.sflag [#allocation5], %s2048
          %s2050 = sand.u32 %s292, 1
          %s2051 = scalar_lea.vmem [#allocation4], %s2050
          %2052 = dma.done %s2049, 16
        $region80: #{fcn_multitask_forward.1} parent=75 // pred_fallthru
          _
      $region76: #{fcn_multitask_forward.1} parent=5 // pred_fallthru
        _
    $region6: #{fcn_multitask_forward.1} parent=1 // loop_footer
      %s25 = sadd.s32 1, %s21
    $region7: #{fcn_multitask_forward.1} parent=1 // loop_footer_branch
      %20 = sbr.rel target = $region3
    $region8: #{fcn_multitask_forward.1} parent=1 // loop_exit
      _
    %2053 = vsyncpa [#allocation5], 1
    %s2054 = scalar_lea.sflag [#allocation5], 1
    %2055 = vsyncpa %s2054, 1

</llo_original>
